<compile_context>
chip_gen: v7x
topology: tpu7x:2x2x1
jax: 0.10.0
libtpu: 0.0.40
codegen_flags: <defaults>
</compile_context>

<pallas_src>
import functools

import jax
import jax.numpy as jnp
from jax.experimental import pallas as pl
from jax.experimental.pallas import tpu as pltpu


def _round_up(x, m):
    return (x + m - 1) // m * m


def eges_kernel(node_ref, ids_ref, attn_ref, ctx_ref, table_ref, out_ref, *,
                num_category, max_length):
    node = node_ref[...]                       # [TB, D] f32
    ctx = ctx_ref[...]                         # [TB, D] f32
    attn = jnp.exp(attn_ref[...])              # [TB, 2] f32 exp(attention[node])
    ids = ids_ref[...]                         # [TB, C*L] int32; -1 == masked token
    table = table_ref[...]                     # [V, D] f32 (resident across steps)

    tb = ids.shape[0]
    vocab = table.shape[0]
    iota_v = jax.lax.broadcasted_iota(jnp.int32, (1, vocab), 1)   # [1, V]

    # In-kernel "gather": accumulate per-row weights over the vocabulary,
    #   row_w[b, v] = sum_c (1/max(cnt_c, 1)) * #{valid tokens of category c == v}
    # so that  sum_c side_embed[b, c, :] == row_w[b, :] @ table.
    row_w = jnp.zeros((tb, vocab), jnp.float32)
    num_valid = jnp.zeros((tb, 1), jnp.float32)
    for c in range(num_category):
        base = c * max_length
        valid_c = (ids[:, base:base + max_length] >= 0).astype(jnp.float32)  # [TB, L]
        cnt_c = jnp.sum(valid_c, axis=1, keepdims=True)                      # [TB, 1]
        num_valid = num_valid + (cnt_c > 0.0).astype(jnp.float32)
        # Hoist the lane-broadcast out of the token loop (JAX does not CSE it).
        inv_c = jnp.broadcast_to(1.0 / jnp.maximum(cnt_c, 1.0), (tb, vocab))  # [TB, V]
        for l in range(max_length):
            id_t = ids[:, base + l:base + l + 1]                             # [TB, 1]
            # Masked tokens carry id == -1 and never match iota -> weight 0
            # (this reproduces torch's masked_fill(isnan, 0) on empty categories).
            row_w = row_w + jnp.where(id_t == iota_v, inv_c, 0.0)

    # One small MXU matmul replaces the old [TB, C, L, D] stream + reductions.
    side_sum = jax.lax.dot_general(
        row_w, table, (((1,), (0,)), ((), ())),
        precision=jax.lax.Precision.HIGHEST,
        preferred_element_type=jnp.float32)                                  # [TB, D]
    # Rows whose categories are all empty give 0/0 = NaN, matching torch.
    side_mean = side_sum / num_valid                                         # [TB, D]

    # H = bmm(attn.unsqueeze(1), cat([node_embed, side_mean], 1)) / attn.sum(-1)
    a0 = attn[:, 0:1]
    a1 = attn[:, 1:2]
    H = (a0 * node + a1 * side_mean) / (a0 + a1)                             # [TB, D]

    # output[b] = <H[b], ctx[b]>, produced as ones(1, D) @ (H*ctx)^T on the
    # (otherwise idle) MXU so the result lands as a lane-dense (1, TB) row and
    # the write-back is an unmasked dense store.
    elt = H * ctx
    ones_row = jnp.ones((1, elt.shape[1]), jnp.float32)
    out_ref[...] = jax.lax.dot_general(
        ones_row, elt, (((1,), (1,)), ((), ())),
        precision=jax.lax.Precision.HIGHEST,
        preferred_element_type=jnp.float32)                                  # [1, TB]


def eges_forward(node, input_ids, attention_mask, context_node, params, *,
                 batch_tile=2048):
    assert batch_tile % 128 == 0
    node_table = params["node_embedding"]        # [node_len, D] f32
    attn_table = params["attention"]             # [node_len, 2] f32
    tok_table = params["side_token_embedding"]   # [vocab, D]    f32

    B = node.shape[0]
    C, L = input_ids.shape[1], input_ids.shape[2]
    D = node_table.shape[1]
    V = tok_table.shape[0]

    # Tile policy: lane-dense (multiple of 128) tiles; >= 2 grid steps once
    # B >= 256 so both v7x TensorCores are fed; large default tile now that the
    # per-row kernel stream is only ~2 KB.
    if B >= 2 * batch_tile:
        TB = batch_tile
    elif B >= 256:
        TB = min(batch_tile, _round_up((B + 1) // 2, 128))
    else:
        TB = _round_up(B, 8)                 # single small block (masked store)
    B_pad = _round_up(B, TB)
    G = B_pad // TB
    pad = B_pad - B

    # Pad the cheap *integer* inputs before any gather so no f32 (or former
    # side-token) array is ever re-copied by jnp.pad.
    node_i = node.astype(jnp.int32)
    ctx_i = context_node.astype(jnp.int32)
    ids = input_ids.astype(jnp.int32)
    msk = attention_mask
    if pad:
        node_i = jnp.pad(node_i, (0, pad))
        ctx_i = jnp.pad(ctx_i, (0, pad))
        ids = jnp.pad(ids, ((0, pad), (0, 0), (0, 0)))
        msk = jnp.pad(msk, ((0, pad), (0, 0), (0, 0)), constant_values=1)

    # Glue: tiny embedding-table gathers stay on XLA's gather path.  The mask
    # is folded into the ids (masked token -> -1) so the kernel streams a
    # single flattened [B, C*L] int32 array instead of ids + mask + embeddings.
    node_emb = node_table[node_i]                                    # [B_pad, D] f32
    ctx_emb = node_table[ctx_i]                                      # [B_pad, D] f32
    attn = attn_table[node_i]                                        # [B_pad, 2] f32
    masked_ids = jnp.where(msk.astype(bool), ids, -1).reshape(B_pad, C * L)

    kernel = functools.partial(eges_kernel, num_category=C, max_length=L)
    out = pl.pallas_call(
        kernel,
        out_shape=jax.ShapeDtypeStruct((1, B_pad), jnp.float32),
        grid=(G,),
        in_specs=[
            pl.BlockSpec((TB, D), lambda i: (i, 0)),          # node_emb
            pl.BlockSpec((TB, C * L), lambda i: (i, 0)),      # masked token ids
            pl.BlockSpec((TB, 2), lambda i: (i, 0)),          # attention params
            pl.BlockSpec((TB, D), lambda i: (i, 0)),          # context_emb
            pl.BlockSpec((V, D), lambda i: (0, 0)),           # token table (resident)
        ],
        out_specs=pl.BlockSpec((1, TB), lambda i: (0, i)),    # lane-dense row
        compiler_params=pltpu.CompilerParams(
            dimension_semantics=("parallel",),   # shards grid over 2 TCs on v7x
            vmem_limit_bytes=48 * 1024 * 1024,   # headroom under v7x's 64 MiB
        ),
    )(node_emb, masked_ids, attn, ctx_emb, tok_table)
    return out[0, :B]                            # [B]  (torch .squeeze())


def eges_reference(node, input_ids, attention_mask, context_node, params):
    """Pure-f32 JAX reference of the same forward semantics (for verification)."""
    node_table = params["node_embedding"]
    attn_table = params["attention"]
    tok_table = params["side_token_embedding"]

    node_emb = node_table[node]
    ctx_emb = node_table[context_node]
    attn = jnp.exp(attn_table[node])
    side_tok = tok_table[input_ids]                                  # [B, C, L, D] f32
    mask = attention_mask.astype(jnp.float32)

    tok_count = jnp.sum(mask, axis=2)
    side_embed = jnp.sum(side_tok * mask[..., None], axis=2) / jnp.maximum(tok_count, 1.0)[..., None]
    side_embed = jnp.where(jnp.isnan(side_embed), 0.0, side_embed)   # torch masked_fill (no-op here)
    is_valid = (tok_count > 0.0).astype(jnp.float32)
    side_mean = jnp.sum(side_embed, axis=1) / jnp.sum(is_valid, axis=1, keepdims=True)

    a0, a1 = attn[:, 0:1], attn[:, 1:2]
    H = (a0 * node_emb + a1 * side_mean) / (a0 + a1)
    return jnp.sum(H * ctx_emb, axis=1)


if __name__ == "__main__":
    # Small, module-consistent shapes.
    NODE_LEN = 16      # node vocabulary
    EMBED_DIM = 32     # embed_dim (== side embedding dim, required by torch.cat)
    VOCAB = 64         # side-info token vocabulary (Electra stand-in)
    MAX_CATEGORY = 3
    MAX_LENGTH = 8

    key = jax.random.PRNGKey(0)
    k_node, k_attn, k_tok, k_ids, k_n, k_c = jax.random.split(key, 6)

    params = {
        # nn.Embedding(node_len, embed_dim) weights
        "node_embedding": 0.02 * jax.random.normal(k_node, (NODE_LEN, EMBED_DIM), jnp.float32),
        # nn.Parameter(torch.rand((node_len, 2)))
        "attention": jax.random.uniform(k_attn, (NODE_LEN, 2), jnp.float32),
        # deterministic stand-in for the Electra side encoder
        "side_token_embedding": 0.02 * jax.random.normal(k_tok, (VOCAB, EMBED_DIM), jnp.float32),
    }

    # --- test 1: tiny batch (single block, B < 256) ---
    B = 2
    node = jax.random.randint(k_n, (B,), 0, NODE_LEN, jnp.int32)
    context_node = jax.random.randint(k_c, (B,), 0, NODE_LEN, jnp.int32)
    input_ids = jax.random.randint(k_ids, (B, MAX_CATEGORY, MAX_LENGTH), 0, VOCAB, jnp.int32)
    attention_mask = jnp.ones((B, MAX_CATEGORY, MAX_LENGTH), jnp.int32)
    attention_mask = attention_mask.at[0, 2, :].set(0)       # fully empty category
    attention_mask = attention_mask.at[1, 1, 5:].set(0)      # partially masked category

    out = jax.block_until_ready(
        eges_forward(node, input_ids, attention_mask, context_node, params))
    ref = eges_reference(node, input_ids, attention_mask, context_node, params)
    assert out.shape == (B,)
    assert jnp.allclose(out, ref, rtol=1e-4, atol=1e-6), (out, ref)

    # --- test 2: multi-tile grid (exercises batch pipelining + padding) ---
    B2 = 300
    k1, k2, k3, k4 = jax.random.split(jax.random.PRNGKey(1), 4)
    node2 = jax.random.randint(k1, (B2,), 0, NODE_LEN, jnp.int32)
    ctx2 = jax.random.randint(k2, (B2,), 0, NODE_LEN, jnp.int32)
    ids2 = jax.random.randint(k3, (B2, MAX_CATEGORY, MAX_LENGTH), 0, VOCAB, jnp.int32)
    mask2 = (jax.random.uniform(k4, (B2, MAX_CATEGORY, MAX_LENGTH)) > 0.3).astype(jnp.int32)
    mask2 = mask2.at[:, :, 0].set(1)   # keep >= 1 valid token per category

    out2 = jax.block_until_ready(
        eges_forward(node2, ids2, mask2, ctx2, params, batch_tile=128))
    ref2 = eges_reference(node2, ids2, mask2, ctx2, params)
    assert out2.shape == (B2,)
    assert jnp.allclose(out2, ref2, rtol=1e-4, atol=1e-6), (out2, ref2)

    print("KERNEL_OK")
</pallas_src>

<mosaic_0001>
module attributes {stable_mosaic.version = 11 : i64} {
  func.func @eges_kernel(%arg0: i32, %arg1: memref<8x32xf32, #tpu.memory_space<vmem>>, %arg2: memref<8x24xi32, #tpu.memory_space<vmem>>, %arg3: memref<8x2xf32, #tpu.memory_space<vmem>>, %arg4: memref<8x32xf32, #tpu.memory_space<vmem>>, %arg5: memref<64x32xf32, #tpu.memory_space<vmem>>, %arg6: memref<1x8xf32, #tpu.memory_space<vmem>>) attributes {dimension_semantics = [#tpu.dimension_semantics<parallel>], iteration_bounds = array<i64: 1>, scalar_prefetch = 0 : i64, scratch_operands = 0 : i64, tpu.core_type = #tpu.core_type<tc>, window_params = [{transform_indices = @transform_0, window_bounds = array<i64: 8, 32>}, {transform_indices = @transform_1, window_bounds = array<i64: 8, 24>}, {transform_indices = @transform_2, window_bounds = array<i64: 8, 2>}, {transform_indices = @transform_3, window_bounds = array<i64: 8, 32>}, {pipeline_mode = #tpu.pipeline_mode<synchronous>, transform_indices = @transform_4, window_bounds = array<i64: 64, 32>}, {transform_indices = @transform_5, window_bounds = array<i64: 1, 8>}]} {
    %c0 = arith.constant 0 : index
    %c0_0 = arith.constant 0 : index
    %0 = vector.load %arg1[%c0, %c0_0] : memref<8x32xf32, #tpu.memory_space<vmem>>, vector<8x32xf32>
    %c0_1 = arith.constant 0 : index
    %c0_2 = arith.constant 0 : index
    %1 = vector.load %arg4[%c0_1, %c0_2] : memref<8x32xf32, #tpu.memory_space<vmem>>, vector<8x32xf32>
    %c0_3 = arith.constant 0 : index
    %c0_4 = arith.constant 0 : index
    %2 = vector.load %arg3[%c0_3, %c0_4] : memref<8x2xf32, #tpu.memory_space<vmem>>, vector<8x2xf32>
    %3 = math.exp %2 : vector<8x2xf32>
    %c0_5 = arith.constant 0 : index
    %c0_6 = arith.constant 0 : index
    %4 = vector.load %arg2[%c0_5, %c0_6] : memref<8x24xi32, #tpu.memory_space<vmem>>, vector<8x24xi32>
    %c0_7 = arith.constant 0 : index
    %c0_8 = arith.constant 0 : index
    %5 = vector.load %arg5[%c0_7, %c0_8] : memref<64x32xf32, #tpu.memory_space<vmem>>, vector<64x32xf32>
    %6 = tpu.iota {dimensions = array<i32: 1>} : vector<1x64xi32>
    %cst = arith.constant 0.000000e+00 : f32
    %7 = vector.broadcast %cst : f32 to vector<8x64xf32>
    %cst_9 = arith.constant 0.000000e+00 : f32
    %8 = vector.broadcast %cst_9 : f32 to vector<8x1xf32>
    %9 = vector.extract_strided_slice %4 {offsets = [0, 0], sizes = [8, 8], strides = [1, 1]} : vector<8x24xi32> to vector<8x8xi32>
    %c0_i32 = arith.constant 0 : i32
    %10 = vector.broadcast %c0_i32 : i32 to vector<8x8xi32>
    %11 = arith.cmpi sge, %9, %10 : vector<8x8xi32>
    %12 = arith.extui %11 : vector<8x8xi1> to vector<8x8xi32>
    %13 = arith.sitofp %12 : vector<8x8xi32> to vector<8x8xf32>
    %cst_10 = arith.constant dense<0.000000e+00> : vector<8xf32>
    %14 = vector.multi_reduction <add>, %13, %cst_10 [1] : vector<8x8xf32> to vector<8xf32>
    %15 = vector.shape_cast %14 : vector<8xf32> to vector<8x1xf32>
    %cst_11 = arith.constant 0.000000e+00 : f32
    %16 = vector.broadcast %cst_11 : f32 to vector<8x1xf32>
    %17 = arith.cmpf ogt, %15, %16 : vector<8x1xf32>
    %18 = arith.extui %17 : vector<8x1xi1> to vector<8x1xi32>
    %19 = arith.sitofp %18 : vector<8x1xi32> to vector<8x1xf32>
    %20 = arith.addf %8, %19 : vector<8x1xf32>
    %cst_12 = arith.constant 1.000000e+00 : f32
    %21 = vector.broadcast %cst_12 : f32 to vector<8x1xf32>
    %22 = arith.maximumf %15, %21 : vector<8x1xf32>
    %cst_13 = arith.constant 1.000000e+00 : f32
    %23 = vector.broadcast %cst_13 : f32 to vector<8x1xf32>
    %24 = arith.divf %23, %22 : vector<8x1xf32>
    %25 = vector.shape_cast %24 : vector<8x1xf32> to vector<8x1xf32>
    %26 = vector.broadcast %25 : vector<8x1xf32> to vector<8x64xf32>
    %27 = vector.extract_strided_slice %4 {offsets = [0, 0], sizes = [8, 1], strides = [1, 1]} : vector<8x24xi32> to vector<8x1xi32>
    %28 = vector.broadcast %27 : vector<8x1xi32> to vector<8x64xi32>
    %29 = vector.broadcast %6 : vector<1x64xi32> to vector<8x64xi32>
    %30 = arith.cmpi eq, %28, %29 : vector<8x64xi32>
    %cst_14 = arith.constant 0.000000e+00 : f32
    %31 = vector.broadcast %cst_14 : f32 to vector<8x64xf32>
    %32 = arith.select %30, %26, %31 : vector<8x64xi1>, vector<8x64xf32>
    %33 = arith.addf %7, %32 : vector<8x64xf32>
    %34 = vector.extract_strided_slice %4 {offsets = [0, 1], sizes = [8, 1], strides = [1, 1]} : vector<8x24xi32> to vector<8x1xi32>
    %35 = vector.broadcast %34 : vector<8x1xi32> to vector<8x64xi32>
    %36 = vector.broadcast %6 : vector<1x64xi32> to vector<8x64xi32>
    %37 = arith.cmpi eq, %35, %36 : vector<8x64xi32>
    %cst_15 = arith.constant 0.000000e+00 : f32
    %38 = vector.broadcast %cst_15 : f32 to vector<8x64xf32>
    %39 = arith.select %37, %26, %38 : vector<8x64xi1>, vector<8x64xf32>
    %40 = arith.addf %33, %39 : vector<8x64xf32>
    %41 = vector.extract_strided_slice %4 {offsets = [0, 2], sizes = [8, 1], strides = [1, 1]} : vector<8x24xi32> to vector<8x1xi32>
    %42 = vector.broadcast %41 : vector<8x1xi32> to vector<8x64xi32>
    %43 = vector.broadcast %6 : vector<1x64xi32> to vector<8x64xi32>
    %44 = arith.cmpi eq, %42, %43 : vector<8x64xi32>
    %cst_16 = arith.constant 0.000000e+00 : f32
    %45 = vector.broadcast %cst_16 : f32 to vector<8x64xf32>
    %46 = arith.select %44, %26, %45 : vector<8x64xi1>, vector<8x64xf32>
    %47 = arith.addf %40, %46 : vector<8x64xf32>
    %48 = vector.extract_strided_slice %4 {offsets = [0, 3], sizes = [8, 1], strides = [1, 1]} : vector<8x24xi32> to vector<8x1xi32>
    %49 = vector.broadcast %48 : vector<8x1xi32> to vector<8x64xi32>
    %50 = vector.broadcast %6 : vector<1x64xi32> to vector<8x64xi32>
    %51 = arith.cmpi eq, %49, %50 : vector<8x64xi32>
    %cst_17 = arith.constant 0.000000e+00 : f32
    %52 = vector.broadcast %cst_17 : f32 to vector<8x64xf32>
    %53 = arith.select %51, %26, %52 : vector<8x64xi1>, vector<8x64xf32>
    %54 = arith.addf %47, %53 : vector<8x64xf32>
    %55 = vector.extract_strided_slice %4 {offsets = [0, 4], sizes = [8, 1], strides = [1, 1]} : vector<8x24xi32> to vector<8x1xi32>
    %56 = vector.broadcast %55 : vector<8x1xi32> to vector<8x64xi32>
    %57 = vector.broadcast %6 : vector<1x64xi32> to vector<8x64xi32>
    %58 = arith.cmpi eq, %56, %57 : vector<8x64xi32>
    %cst_18 = arith.constant 0.000000e+00 : f32
    %59 = vector.broadcast %cst_18 : f32 to vector<8x64xf32>
    %60 = arith.select %58, %26, %59 : vector<8x64xi1>, vector<8x64xf32>
    %61 = arith.addf %54, %60 : vector<8x64xf32>
    %62 = vector.extract_strided_slice %4 {offsets = [0, 5], sizes = [8, 1], strides = [1, 1]} : vector<8x24xi32> to vector<8x1xi32>
    %63 = vector.broadcast %62 : vector<8x1xi32> to vector<8x64xi32>
    %64 = vector.broadcast %6 : vector<1x64xi32> to vector<8x64xi32>
    %65 = arith.cmpi eq, %63, %64 : vector<8x64xi32>
    %cst_19 = arith.constant 0.000000e+00 : f32
    %66 = vector.broadcast %cst_19 : f32 to vector<8x64xf32>
    %67 = arith.select %65, %26, %66 : vector<8x64xi1>, vector<8x64xf32>
    %68 = arith.addf %61, %67 : vector<8x64xf32>
    %69 = vector.extract_strided_slice %4 {offsets = [0, 6], sizes = [8, 1], strides = [1, 1]} : vector<8x24xi32> to vector<8x1xi32>
    %70 = vector.broadcast %69 : vector<8x1xi32> to vector<8x64xi32>
    %71 = vector.broadcast %6 : vector<1x64xi32> to vector<8x64xi32>
    %72 = arith.cmpi eq, %70, %71 : vector<8x64xi32>
    %cst_20 = arith.constant 0.000000e+00 : f32
    %73 = vector.broadcast %cst_20 : f32 to vector<8x64xf32>
    %74 = arith.select %72, %26, %73 : vector<8x64xi1>, vector<8x64xf32>
    %75 = arith.addf %68, %74 : vector<8x64xf32>
    %76 = vector.extract_strided_slice %4 {offsets = [0, 7], sizes = [8, 1], strides = [1, 1]} : vector<8x24xi32> to vector<8x1xi32>
    %77 = vector.broadcast %76 : vector<8x1xi32> to vector<8x64xi32>
    %78 = vector.broadcast %6 : vector<1x64xi32> to vector<8x64xi32>
    %79 = arith.cmpi eq, %77, %78 : vector<8x64xi32>
    %cst_21 = arith.constant 0.000000e+00 : f32
    %80 = vector.broadcast %cst_21 : f32 to vector<8x64xf32>
    %81 = arith.select %79, %26, %80 : vector<8x64xi1>, vector<8x64xf32>
    %82 = arith.addf %75, %81 : vector<8x64xf32>
    %83 = vector.extract_strided_slice %4 {offsets = [0, 8], sizes = [8, 8], strides = [1, 1]} : vector<8x24xi32> to vector<8x8xi32>
    %c0_i32_22 = arith.constant 0 : i32
    %84 = vector.broadcast %c0_i32_22 : i32 to vector<8x8xi32>
    %85 = arith.cmpi sge, %83, %84 : vector<8x8xi32>
    %86 = arith.extui %85 : vector<8x8xi1> to vector<8x8xi32>
    %87 = arith.sitofp %86 : vector<8x8xi32> to vector<8x8xf32>
    %cst_23 = arith.constant dense<0.000000e+00> : vector<8xf32>
    %88 = vector.multi_reduction <add>, %87, %cst_23 [1] : vector<8x8xf32> to vector<8xf32>
    %89 = vector.shape_cast %88 : vector<8xf32> to vector<8x1xf32>
    %cst_24 = arith.constant 0.000000e+00 : f32
    %90 = vector.broadcast %cst_24 : f32 to vector<8x1xf32>
    %91 = arith.cmpf ogt, %89, %90 : vector<8x1xf32>
    %92 = arith.extui %91 : vector<8x1xi1> to vector<8x1xi32>
    %93 = arith.sitofp %92 : vector<8x1xi32> to vector<8x1xf32>
    %94 = arith.addf %20, %93 : vector<8x1xf32>
    %cst_25 = arith.constant 1.000000e+00 : f32
    %95 = vector.broadcast %cst_25 : f32 to vector<8x1xf32>
    %96 = arith.maximumf %89, %95 : vector<8x1xf32>
    %cst_26 = arith.constant 1.000000e+00 : f32
    %97 = vector.broadcast %cst_26 : f32 to vector<8x1xf32>
    %98 = arith.divf %97, %96 : vector<8x1xf32>
    %99 = vector.shape_cast %98 : vector<8x1xf32> to vector<8x1xf32>
    %100 = vector.broadcast %99 : vector<8x1xf32> to vector<8x64xf32>
    %101 = vector.extract_strided_slice %4 {offsets = [0, 8], sizes = [8, 1], strides = [1, 1]} : vector<8x24xi32> to vector<8x1xi32>
    %102 = vector.broadcast %101 : vector<8x1xi32> to vector<8x64xi32>
    %103 = vector.broadcast %6 : vector<1x64xi32> to vector<8x64xi32>
    %104 = arith.cmpi eq, %102, %103 : vector<8x64xi32>
    %cst_27 = arith.constant 0.000000e+00 : f32
    %105 = vector.broadcast %cst_27 : f32 to vector<8x64xf32>
    %106 = arith.select %104, %100, %105 : vector<8x64xi1>, vector<8x64xf32>
    %107 = arith.addf %82, %106 : vector<8x64xf32>
    %108 = vector.extract_strided_slice %4 {offsets = [0, 9], sizes = [8, 1], strides = [1, 1]} : vector<8x24xi32> to vector<8x1xi32>
    %109 = vector.broadcast %108 : vector<8x1xi32> to vector<8x64xi32>
    %110 = vector.broadcast %6 : vector<1x64xi32> to vector<8x64xi32>
    %111 = arith.cmpi eq, %109, %110 : vector<8x64xi32>
    %cst_28 = arith.constant 0.000000e+00 : f32
    %112 = vector.broadcast %cst_28 : f32 to vector<8x64xf32>
    %113 = arith.select %111, %100, %112 : vector<8x64xi1>, vector<8x64xf32>
    %114 = arith.addf %107, %113 : vector<8x64xf32>
    %115 = vector.extract_strided_slice %4 {offsets = [0, 10], sizes = [8, 1], strides = [1, 1]} : vector<8x24xi32> to vector<8x1xi32>
    %116 = vector.broadcast %115 : vector<8x1xi32> to vector<8x64xi32>
    %117 = vector.broadcast %6 : vector<1x64xi32> to vector<8x64xi32>
    %118 = arith.cmpi eq, %116, %117 : vector<8x64xi32>
    %cst_29 = arith.constant 0.000000e+00 : f32
    %119 = vector.broadcast %cst_29 : f32 to vector<8x64xf32>
    %120 = arith.select %118, %100, %119 : vector<8x64xi1>, vector<8x64xf32>
    %121 = arith.addf %114, %120 : vector<8x64xf32>
    %122 = vector.extract_strided_slice %4 {offsets = [0, 11], sizes = [8, 1], strides = [1, 1]} : vector<8x24xi32> to vector<8x1xi32>
    %123 = vector.broadcast %122 : vector<8x1xi32> to vector<8x64xi32>
    %124 = vector.broadcast %6 : vector<1x64xi32> to vector<8x64xi32>
    %125 = arith.cmpi eq, %123, %124 : vector<8x64xi32>
    %cst_30 = arith.constant 0.000000e+00 : f32
    %126 = vector.broadcast %cst_30 : f32 to vector<8x64xf32>
    %127 = arith.select %125, %100, %126 : vector<8x64xi1>, vector<8x64xf32>
    %128 = arith.addf %121, %127 : vector<8x64xf32>
    %129 = vector.extract_strided_slice %4 {offsets = [0, 12], sizes = [8, 1], strides = [1, 1]} : vector<8x24xi32> to vector<8x1xi32>
    %130 = vector.broadcast %129 : vector<8x1xi32> to vector<8x64xi32>
    %131 = vector.broadcast %6 : vector<1x64xi32> to vector<8x64xi32>
    %132 = arith.cmpi eq, %130, %131 : vector<8x64xi32>
    %cst_31 = arith.constant 0.000000e+00 : f32
    %133 = vector.broadcast %cst_31 : f32 to vector<8x64xf32>
    %134 = arith.select %132, %100, %133 : vector<8x64xi1>, vector<8x64xf32>
    %135 = arith.addf %128, %134 : vector<8x64xf32>
    %136 = vector.extract_strided_slice %4 {offsets = [0, 13], sizes = [8, 1], strides = [1, 1]} : vector<8x24xi32> to vector<8x1xi32>
    %137 = vector.broadcast %136 : vector<8x1xi32> to vector<8x64xi32>
    %138 = vector.broadcast %6 : vector<1x64xi32> to vector<8x64xi32>
    %139 = arith.cmpi eq, %137, %138 : vector<8x64xi32>
    %cst_32 = arith.constant 0.000000e+00 : f32
    %140 = vector.broadcast %cst_32 : f32 to vector<8x64xf32>
    %141 = arith.select %139, %100, %140 : vector<8x64xi1>, vector<8x64xf32>
    %142 = arith.addf %135, %141 : vector<8x64xf32>
    %143 = vector.extract_strided_slice %4 {offsets = [0, 14], sizes = [8, 1], strides = [1, 1]} : vector<8x24xi32> to vector<8x1xi32>
    %144 = vector.broadcast %143 : vector<8x1xi32> to vector<8x64xi32>
    %145 = vector.broadcast %6 : vector<1x64xi32> to vector<8x64xi32>
    %146 = arith.cmpi eq, %144, %145 : vector<8x64xi32>
    %cst_33 = arith.constant 0.000000e+00 : f32
    %147 = vector.broadcast %cst_33 : f32 to vector<8x64xf32>
    %148 = arith.select %146, %100, %147 : vector<8x64xi1>, vector<8x64xf32>
    %149 = arith.addf %142, %148 : vector<8x64xf32>
    %150 = vector.extract_strided_slice %4 {offsets = [0, 15], sizes = [8, 1], strides = [1, 1]} : vector<8x24xi32> to vector<8x1xi32>
    %151 = vector.broadcast %150 : vector<8x1xi32> to vector<8x64xi32>
    %152 = vector.broadcast %6 : vector<1x64xi32> to vector<8x64xi32>
    %153 = arith.cmpi eq, %151, %152 : vector<8x64xi32>
    %cst_34 = arith.constant 0.000000e+00 : f32
    %154 = vector.broadcast %cst_34 : f32 to vector<8x64xf32>
    %155 = arith.select %153, %100, %154 : vector<8x64xi1>, vector<8x64xf32>
    %156 = arith.addf %149, %155 : vector<8x64xf32>
    %157 = vector.extract_strided_slice %4 {offsets = [0, 16], sizes = [8, 8], strides = [1, 1]} : vector<8x24xi32> to vector<8x8xi32>
    %c0_i32_35 = arith.constant 0 : i32
    %158 = vector.broadcast %c0_i32_35 : i32 to vector<8x8xi32>
    %159 = arith.cmpi sge, %157, %158 : vector<8x8xi32>
    %160 = arith.extui %159 : vector<8x8xi1> to vector<8x8xi32>
    %161 = arith.sitofp %160 : vector<8x8xi32> to vector<8x8xf32>
    %cst_36 = arith.constant dense<0.000000e+00> : vector<8xf32>
    %162 = vector.multi_reduction <add>, %161, %cst_36 [1] : vector<8x8xf32> to vector<8xf32>
    %163 = vector.shape_cast %162 : vector<8xf32> to vector<8x1xf32>
    %cst_37 = arith.constant 0.000000e+00 : f32
    %164 = vector.broadcast %cst_37 : f32 to vector<8x1xf32>
    %165 = arith.cmpf ogt, %163, %164 : vector<8x1xf32>
    %166 = arith.extui %165 : vector<8x1xi1> to vector<8x1xi32>
    %167 = arith.sitofp %166 : vector<8x1xi32> to vector<8x1xf32>
    %168 = arith.addf %94, %167 : vector<8x1xf32>
    %cst_38 = arith.constant 1.000000e+00 : f32
    %169 = vector.broadcast %cst_38 : f32 to vector<8x1xf32>
    %170 = arith.maximumf %163, %169 : vector<8x1xf32>
    %cst_39 = arith.constant 1.000000e+00 : f32
    %171 = vector.broadcast %cst_39 : f32 to vector<8x1xf32>
    %172 = arith.divf %171, %170 : vector<8x1xf32>
    %173 = vector.shape_cast %172 : vector<8x1xf32> to vector<8x1xf32>
    %174 = vector.broadcast %173 : vector<8x1xf32> to vector<8x64xf32>
    %175 = vector.extract_strided_slice %4 {offsets = [0, 16], sizes = [8, 1], strides = [1, 1]} : vector<8x24xi32> to vector<8x1xi32>
    %176 = vector.broadcast %175 : vector<8x1xi32> to vector<8x64xi32>
    %177 = vector.broadcast %6 : vector<1x64xi32> to vector<8x64xi32>
    %178 = arith.cmpi eq, %176, %177 : vector<8x64xi32>
    %cst_40 = arith.constant 0.000000e+00 : f32
    %179 = vector.broadcast %cst_40 : f32 to vector<8x64xf32>
    %180 = arith.select %178, %174, %179 : vector<8x64xi1>, vector<8x64xf32>
    %181 = arith.addf %156, %180 : vector<8x64xf32>
    %182 = vector.extract_strided_slice %4 {offsets = [0, 17], sizes = [8, 1], strides = [1, 1]} : vector<8x24xi32> to vector<8x1xi32>
    %183 = vector.broadcast %182 : vector<8x1xi32> to vector<8x64xi32>
    %184 = vector.broadcast %6 : vector<1x64xi32> to vector<8x64xi32>
    %185 = arith.cmpi eq, %183, %184 : vector<8x64xi32>
    %cst_41 = arith.constant 0.000000e+00 : f32
    %186 = vector.broadcast %cst_41 : f32 to vector<8x64xf32>
    %187 = arith.select %185, %174, %186 : vector<8x64xi1>, vector<8x64xf32>
    %188 = arith.addf %181, %187 : vector<8x64xf32>
    %189 = vector.extract_strided_slice %4 {offsets = [0, 18], sizes = [8, 1], strides = [1, 1]} : vector<8x24xi32> to vector<8x1xi32>
    %190 = vector.broadcast %189 : vector<8x1xi32> to vector<8x64xi32>
    %191 = vector.broadcast %6 : vector<1x64xi32> to vector<8x64xi32>
    %192 = arith.cmpi eq, %190, %191 : vector<8x64xi32>
    %cst_42 = arith.constant 0.000000e+00 : f32
    %193 = vector.broadcast %cst_42 : f32 to vector<8x64xf32>
    %194 = arith.select %192, %174, %193 : vector<8x64xi1>, vector<8x64xf32>
    %195 = arith.addf %188, %194 : vector<8x64xf32>
    %196 = vector.extract_strided_slice %4 {offsets = [0, 19], sizes = [8, 1], strides = [1, 1]} : vector<8x24xi32> to vector<8x1xi32>
    %197 = vector.broadcast %196 : vector<8x1xi32> to vector<8x64xi32>
    %198 = vector.broadcast %6 : vector<1x64xi32> to vector<8x64xi32>
    %199 = arith.cmpi eq, %197, %198 : vector<8x64xi32>
    %cst_43 = arith.constant 0.000000e+00 : f32
    %200 = vector.broadcast %cst_43 : f32 to vector<8x64xf32>
    %201 = arith.select %199, %174, %200 : vector<8x64xi1>, vector<8x64xf32>
    %202 = arith.addf %195, %201 : vector<8x64xf32>
    %203 = vector.extract_strided_slice %4 {offsets = [0, 20], sizes = [8, 1], strides = [1, 1]} : vector<8x24xi32> to vector<8x1xi32>
    %204 = vector.broadcast %203 : vector<8x1xi32> to vector<8x64xi32>
    %205 = vector.broadcast %6 : vector<1x64xi32> to vector<8x64xi32>
    %206 = arith.cmpi eq, %204, %205 : vector<8x64xi32>
    %cst_44 = arith.constant 0.000000e+00 : f32
    %207 = vector.broadcast %cst_44 : f32 to vector<8x64xf32>
    %208 = arith.select %206, %174, %207 : vector<8x64xi1>, vector<8x64xf32>
    %209 = arith.addf %202, %208 : vector<8x64xf32>
    %210 = vector.extract_strided_slice %4 {offsets = [0, 21], sizes = [8, 1], strides = [1, 1]} : vector<8x24xi32> to vector<8x1xi32>
    %211 = vector.broadcast %210 : vector<8x1xi32> to vector<8x64xi32>
    %212 = vector.broadcast %6 : vector<1x64xi32> to vector<8x64xi32>
    %213 = arith.cmpi eq, %211, %212 : vector<8x64xi32>
    %cst_45 = arith.constant 0.000000e+00 : f32
    %214 = vector.broadcast %cst_45 : f32 to vector<8x64xf32>
    %215 = arith.select %213, %174, %214 : vector<8x64xi1>, vector<8x64xf32>
    %216 = arith.addf %209, %215 : vector<8x64xf32>
    %217 = vector.extract_strided_slice %4 {offsets = [0, 22], sizes = [8, 1], strides = [1, 1]} : vector<8x24xi32> to vector<8x1xi32>
    %218 = vector.broadcast %217 : vector<8x1xi32> to vector<8x64xi32>
    %219 = vector.broadcast %6 : vector<1x64xi32> to vector<8x64xi32>
    %220 = arith.cmpi eq, %218, %219 : vector<8x64xi32>
    %cst_46 = arith.constant 0.000000e+00 : f32
    %221 = vector.broadcast %cst_46 : f32 to vector<8x64xf32>
    %222 = arith.select %220, %174, %221 : vector<8x64xi1>, vector<8x64xf32>
    %223 = arith.addf %216, %222 : vector<8x64xf32>
    %224 = vector.extract_strided_slice %4 {offsets = [0, 23], sizes = [8, 1], strides = [1, 1]} : vector<8x24xi32> to vector<8x1xi32>
    %225 = vector.broadcast %224 : vector<8x1xi32> to vector<8x64xi32>
    %226 = vector.broadcast %6 : vector<1x64xi32> to vector<8x64xi32>
    %227 = arith.cmpi eq, %225, %226 : vector<8x64xi32>
    %cst_47 = arith.constant 0.000000e+00 : f32
    %228 = vector.broadcast %cst_47 : f32 to vector<8x64xf32>
    %229 = arith.select %227, %174, %228 : vector<8x64xi1>, vector<8x64xf32>
    %230 = arith.addf %223, %229 : vector<8x64xf32>
    %cst_48 = arith.constant dense<0.000000e+00> : vector<8x32xf32>
    %231 = tpu.matmul %230, %5, %cst_48 {dimension_numbers = #tpu.dot_dimension_numbers<[1], [0], [0], [1], [0, 0, 1, 1], [], []>, precision = #tpu.contract_precision<fp32>} : vector<8x64xf32>, vector<64x32xf32>, vector<8x32xf32> -> vector<8x32xf32>
    %232 = vector.broadcast %168 : vector<8x1xf32> to vector<8x32xf32>
    %233 = arith.divf %231, %232 : vector<8x32xf32>
    %234 = vector.extract_strided_slice %3 {offsets = [0, 0], sizes = [8, 1], strides = [1, 1]} : vector<8x2xf32> to vector<8x1xf32>
    %235 = vector.extract_strided_slice %3 {offsets = [0, 1], sizes = [8, 1], strides = [1, 1]} : vector<8x2xf32> to vector<8x1xf32>
    %236 = vector.broadcast %234 : vector<8x1xf32> to vector<8x32xf32>
    %237 = arith.mulf %236, %0 : vector<8x32xf32>
    %238 = vector.broadcast %235 : vector<8x1xf32> to vector<8x32xf32>
    %239 = arith.mulf %238, %233 : vector<8x32xf32>
    %240 = arith.addf %237, %239 : vector<8x32xf32>
    %241 = arith.addf %234, %235 : vector<8x1xf32>
    %242 = vector.broadcast %241 : vector<8x1xf32> to vector<8x32xf32>
    %243 = arith.divf %240, %242 : vector<8x32xf32>
    %244 = arith.mulf %243, %1 : vector<8x32xf32>
    %cst_49 = arith.constant 1.000000e+00 : f32
    %245 = vector.broadcast %cst_49 : f32 to vector<1x32xf32>
    %cst_50 = arith.constant dense<0.000000e+00> : vector<1x8xf32>
    %246 = tpu.matmul %245, %244, %cst_50 {dimension_numbers = #tpu.dot_dimension_numbers<[1], [1], [0], [0], [0, 0, 1, 0], [], []>, precision = #tpu.contract_precision<fp32>} : vector<1x32xf32>, vector<8x32xf32>, vector<1x8xf32> -> vector<1x8xf32>
    %c0_51 = arith.constant 0 : index
    %c0_52 = arith.constant 0 : index
    %247 = vector.load %arg6[%c0_51, %c0_52] : memref<1x8xf32, #tpu.memory_space<vmem>>, vector<1x8xf32>
    tpu.vector_store %arg6[%c0_51, %c0_52], %246 {strides = array<i32>} : memref<1x8xf32, #tpu.memory_space<vmem>>, vector<1x8xf32>,
    return
  }
  func.func @transform_0(%arg0: i32) -> (i32, i32) {
    %c0_i32 = arith.constant 0 : i32
    %c0_i32_0 = arith.constant 0 : i32
    return %arg0, %c0_i32 : i32, i32
  }
  func.func @transform_1(%arg0: i32) -> (i32, i32) {
    %c0_i32 = arith.constant 0 : i32
    %c0_i32_0 = arith.constant 0 : i32
    return %arg0, %c0_i32 : i32, i32
  }
  func.func @transform_2(%arg0: i32) -> (i32, i32) {
    %c0_i32 = arith.constant 0 : i32
    %c0_i32_0 = arith.constant 0 : i32
    return %arg0, %c0_i32 : i32, i32
  }
  func.func @transform_3(%arg0: i32) -> (i32, i32) {
    %c0_i32 = arith.constant 0 : i32
    %c0_i32_0 = arith.constant 0 : i32
    return %arg0, %c0_i32 : i32, i32
  }
  func.func @transform_4(%arg0: i32) -> (i32, i32) {
    %c0_i32 = arith.constant 0 : i32
    %c0_i32_0 = arith.constant 0 : i32
    %c0_i32_1 = arith.constant 0 : i32
    return %c0_i32, %c0_i32_0 : i32, i32
  }
  func.func @transform_5(%arg0: i32) -> (i32, i32) {
    %c0_i32 = arith.constant 0 : i32
    %c0_i32_0 = arith.constant 0 : i32
    return %c0_i32, %arg0 : i32, i32
  }
}

</mosaic_0001>

<llo_original>
// kernel: tpu_custom_call.1
$region0: #{tpu_custom_call.1}
  #allocation0 [shape = 'u32[]', space=smem, size = 0x4, offset = 0x4, fixed_abs, tag = 'smem constant byte address 0x4 - core index']
  #allocation1 [shape = 'u32[144,128]{1,0:T(1,128)}', space=vmem, size = 0x12000, scoped, tag = 'internal scratch']
  %s0 = inlined_call_operand.vmem [shape: f32[8,32], index: 0, kind: input, shape index: {}]
  %s1 = inlined_call_operand.vmem [shape: s32[8,24], index: 1, kind: input, shape index: {}]
  %s2 = inlined_call_operand.vmem [shape: f32[8,2], index: 2, kind: input, shape index: {}]
  %s3 = inlined_call_operand.vmem [shape: f32[8,32], index: 3, kind: input, shape index: {}]
  %s4 = inlined_call_operand.vmem [shape: f32[64,32], index: 4, kind: input, shape index: {}]
  %s5 = inlined_call_operand.hbm [shape: f32[1,8], index: 5, kind: output, shape index: {}]
  %s6 = sld [smem:[#allocation0]]
  $region30: #{tpu_custom_call.1} parent=0
    _
  %s8 = ssub.s32 1, %s6
  %s9 = scalar_select 0, %s8, %s6
  $region1: #{tpu_custom_call.1} parent=0
    #allocation2 [shape = 'u8[512]{0}', space=vmem, size = 0x400, scoped, tag = 'output window, operand 0, single buffered']
    #allocation3 [shape = 's32[1]{0}', space=sflag, size = 0x4, scoped, tag = 'scoped memory for tpu_custom_call.1']
    %10 = vsyncpa [#allocation3], 0
    // Predicated region
    $region2: #{tpu_custom_call.1} parent=1 // pred_check
      _
    $region3: #{tpu_custom_call.1} parent=1 // pred_check_branch
      %12 = sbr.rel (0) target = $region5
    $region4: #{tpu_custom_call.1} parent=1 // pred_region
      _
    $region5: #{tpu_custom_call.1} parent=1 // pred_fallthru
      _
    // Predicated region
    $region6: #{tpu_custom_call.1} parent=1 // pred_check
      _
    $region7: #{tpu_custom_call.1} parent=1 // pred_check_branch
      %14 = sbr.rel (0) target = $region9
    $region8: #{tpu_custom_call.1} parent=1 // pred_region
      _
    $region9: #{tpu_custom_call.1} parent=1 // pred_fallthru
      _
    // Predicated region
    $region10: #{tpu_custom_call.1} parent=1 // pred_check
      _
    $region11: #{tpu_custom_call.1} parent=1 // pred_check_branch
      %16 = sbr.rel (0) target = $region13
    $region12: #{tpu_custom_call.1} parent=1 // pred_region
      _
    $region13: #{tpu_custom_call.1} parent=1 // pred_fallthru
      _
    // Predicated region
    $region14: #{tpu_custom_call.1} parent=1 // pred_check
      _
    $region15: #{tpu_custom_call.1} parent=1 // pred_check_branch
      %18 = sbr.rel (0) target = $region17
    $region16: #{tpu_custom_call.1} parent=1 // pred_region
      _
    $region17: #{tpu_custom_call.1} parent=1 // pred_fallthru
      _
    // Predicated region
    $region18: #{tpu_custom_call.1} parent=1 // pred_check
      _
    $region19: #{tpu_custom_call.1} parent=1 // pred_check_branch
      %20 = sbr.rel (0) target = $region21
    $region20: #{tpu_custom_call.1} parent=1 // pred_region
      _
    $region21: #{tpu_custom_call.1} parent=1 // pred_fallthru
      _
    %v21 = vld [vmem:[%s0] sm:$0xff]
    %v22 = vld [vmem:[%s3] sm:$0xff]
    %v23 = vld [vmem:[%s2] sm:$0xff]
    %v24 = vmul.f32 %v23, 1.442695
    %v25 = vpow.pop %v24
    %v26 = vld [vmem:[%s1] sm:$0xff]
    %v27 = vld [vmem:[%s4] sm:$0xff]
    %v28 = vld [vmem:[%s4 + $0x8] sm:$0xff]
    %v29 = vld [vmem:[%s4 + $0x10] sm:$0xff]
    %v30 = vld [vmem:[%s4 + $0x18] sm:$0xff]
    %v31 = vld [vmem:[%s4 + $0x20] sm:$0xff]
    %v32 = vld [vmem:[%s4 + $0x28] sm:$0xff]
    %v33 = vld [vmem:[%s4 + $0x30] sm:$0xff]
    %v34 = vld [vmem:[%s4 + $0x38] sm:$0xff]
    %v35 = vlaneseq
    %v36 = vand.u32 %v35, 127
    %vm37 = vcmp.ge.s32.totalorder %v26, 0
    %v38 = vsel %vm37, 1, 0
    %v39 = vcvt.s32.f32 %v38
    %vm40 = vcmask 64512
    %v41 = vsel %vm40, %v39, 0.0
    %42 = vadd.xlane.f32.xlu0 %v41
    %v43 = vpop.xlane.xlu0 %42
    %vm44 = vcmp.gt.f32.partialorder %v43, 0.0
    %v45 = vsel %vm44, 1, 0
    %v46 = vcvt.s32.f32 %v45
    %v47 = vadd.f32 %v46, 0.0
    %v48 = vmax.f32 %v43, 1.0
    %v49 = vrcp.pop %v48
    %v50 = vmul.f32 1.0, %v49
    %51 = vset.pattern.permute.xlu0 0
    %52 = vperm.xlu0 %51, %v26
    %v53 = vpop.permute.xlu0 %52
    %vm54 = vcmp.eq.s32.totalorder %v53, %v36
    %v55 = vsel %vm54, %v50, 0.0
    %v56 = vadd.f32 %v55, 0.0
    %57 = vset.pattern.permute.xlu0 1
    %58 = vperm.xlu0 %57, %v26
    %v59 = vpop.permute.xlu0 %58
    %vm60 = vcmp.eq.s32.totalorder %v59, %v36
    %v61 = vsel %vm60, %v50, 0.0
    %v62 = vadd.f32 %v56, %v61
    %63 = vset.pattern.permute.xlu0 2
    %64 = vperm.xlu0 %63, %v26
    %v65 = vpop.permute.xlu0 %64
    %vm66 = vcmp.eq.s32.totalorder %v65, %v36
    %v67 = vsel %vm66, %v50, 0.0
    %v68 = vadd.f32 %v62, %v67
    %69 = vset.pattern.permute.xlu0 3
    %70 = vperm.xlu0 %69, %v26
    %v71 = vpop.permute.xlu0 %70
    %vm72 = vcmp.eq.s32.totalorder %v71, %v36
    %v73 = vsel %vm72, %v50, 0.0
    %v74 = vadd.f32 %v68, %v73
    %75 = vset.pattern.permute.xlu0 4
    %76 = vperm.xlu0 %75, %v26
    %v77 = vpop.permute.xlu0 %76
    %vm78 = vcmp.eq.s32.totalorder %v77, %v36
    %v79 = vsel %vm78, %v50, 0.0
    %v80 = vadd.f32 %v74, %v79
    %81 = vset.pattern.permute.xlu0 5
    %82 = vperm.xlu0 %81, %v26
    %v83 = vpop.permute.xlu0 %82
    %vm84 = vcmp.eq.s32.totalorder %v83, %v36
    %v85 = vsel %vm84, %v50, 0.0
    %v86 = vadd.f32 %v80, %v85
    %87 = vset.pattern.permute.xlu0 6
    %88 = vperm.xlu0 %87, %v26
    %v89 = vpop.permute.xlu0 %88
    %vm90 = vcmp.eq.s32.totalorder %v89, %v36
    %v91 = vsel %vm90, %v50, 0.0
    %v92 = vadd.f32 %v86, %v91
    %93 = vset.pattern.permute.xlu0 7
    %94 = vperm.xlu0 %93, %v26
    %v95 = vpop.permute.xlu0 %94
    %vm96 = vcmp.eq.s32.totalorder %v95, %v36
    %v97 = vsel %vm96, %v50, 0.0
    %v98 = vadd.f32 %v92, %v97
    %100 = vrot.lane.b32.xlu0 %v39, 120
    %v101 = vpop.permute.xlu0 %100
    %v103 = vsel %vm40, %v101, 0.0
    %104 = vadd.xlane.f32.xlu0 %v103
    %v105 = vpop.xlane.xlu0 %104
    %vm106 = vcmp.gt.f32.partialorder %v105, 0.0
    %v107 = vsel %vm106, 1, 0
    %v108 = vcvt.s32.f32 %v107
    %v109 = vadd.f32 %v47, %v108
    %v110 = vmax.f32 %v105, 1.0
    %v111 = vrcp.pop %v110
    %v112 = vmul.f32 1.0, %v111
    %113 = vset.pattern.permute.xlu0 8
    %114 = vperm.xlu0 %113, %v26
    %v115 = vpop.permute.xlu0 %114
    %vm116 = vcmp.eq.s32.totalorder %v115, %v36
    %v117 = vsel %vm116, %v112, 0.0
    %v118 = vadd.f32 %v98, %v117
    %119 = vset.pattern.permute.xlu0 9
    %120 = vperm.xlu0 %119, %v26
    %v121 = vpop.permute.xlu0 %120
    %vm122 = vcmp.eq.s32.totalorder %v121, %v36
    %v123 = vsel %vm122, %v112, 0.0
    %v124 = vadd.f32 %v118, %v123
    %125 = vset.pattern.permute.xlu0 10
    %126 = vperm.xlu0 %125, %v26
    %v127 = vpop.permute.xlu0 %126
    %vm128 = vcmp.eq.s32.totalorder %v127, %v36
    %v129 = vsel %vm128, %v112, 0.0
    %v130 = vadd.f32 %v124, %v129
    %131 = vset.pattern.permute.xlu0 11
    %132 = vperm.xlu0 %131, %v26
    %v133 = vpop.permute.xlu0 %132
    %vm134 = vcmp.eq.s32.totalorder %v133, %v36
    %v135 = vsel %vm134, %v112, 0.0
    %v136 = vadd.f32 %v130, %v135
    %137 = vset.pattern.permute.xlu0 12
    %138 = vperm.xlu0 %137, %v26
    %v139 = vpop.permute.xlu0 %138
    %vm140 = vcmp.eq.s32.totalorder %v139, %v36
    %v141 = vsel %vm140, %v112, 0.0
    %v142 = vadd.f32 %v136, %v141
    %143 = vset.pattern.permute.xlu0 13
    %144 = vperm.xlu0 %143, %v26
    %v145 = vpop.permute.xlu0 %144
    %vm146 = vcmp.eq.s32.totalorder %v145, %v36
    %v147 = vsel %vm146, %v112, 0.0
    %v148 = vadd.f32 %v142, %v147
    %149 = vset.pattern.permute.xlu0 14
    %150 = vperm.xlu0 %149, %v26
    %v151 = vpop.permute.xlu0 %150
    %vm152 = vcmp.eq.s32.totalorder %v151, %v36
    %v153 = vsel %vm152, %v112, 0.0
    %v154 = vadd.f32 %v148, %v153
    %155 = vset.pattern.permute.xlu0 15
    %156 = vperm.xlu0 %155, %v26
    %v157 = vpop.permute.xlu0 %156
    %vm158 = vcmp.eq.s32.totalorder %v157, %v36
    %v159 = vsel %vm158, %v112, 0.0
    %v160 = vadd.f32 %v154, %v159
    %161 = vrot.lane.b32.xlu0 %v39, 112
    %v162 = vpop.permute.xlu0 %161
    %v164 = vsel %vm40, %v162, 0.0
    %165 = vadd.xlane.f32.xlu0 %v164
    %v166 = vpop.xlane.xlu0 %165
    %vm167 = vcmp.gt.f32.partialorder %v166, 0.0
    %v168 = vsel %vm167, 1, 0
    %v169 = vcvt.s32.f32 %v168
    %v170 = vadd.f32 %v109, %v169
    %v171 = vmax.f32 %v166, 1.0
    %v172 = vrcp.pop %v171
    %v173 = vmul.f32 1.0, %v172
    %174 = vset.pattern.permute.xlu0 16
    %175 = vperm.xlu0 %174, %v26
    %v176 = vpop.permute.xlu0 %175
    %vm177 = vcmp.eq.s32.totalorder %v176, %v36
    %v178 = vsel %vm177, %v173, 0.0
    %v179 = vadd.f32 %v160, %v178
    %180 = vset.pattern.permute.xlu0 17
    %181 = vperm.xlu0 %180, %v26
    %v182 = vpop.permute.xlu0 %181
    %vm183 = vcmp.eq.s32.totalorder %v182, %v36
    %v184 = vsel %vm183, %v173, 0.0
    %v185 = vadd.f32 %v179, %v184
    %186 = vset.pattern.permute.xlu0 18
    %187 = vperm.xlu0 %186, %v26
    %v188 = vpop.permute.xlu0 %187
    %vm189 = vcmp.eq.s32.totalorder %v188, %v36
    %v190 = vsel %vm189, %v173, 0.0
    %v191 = vadd.f32 %v185, %v190
    %192 = vset.pattern.permute.xlu0 19
    %193 = vperm.xlu0 %192, %v26
    %v194 = vpop.permute.xlu0 %193
    %vm195 = vcmp.eq.s32.totalorder %v194, %v36
    %v196 = vsel %vm195, %v173, 0.0
    %v197 = vadd.f32 %v191, %v196
    %198 = vset.pattern.permute.xlu0 20
    %199 = vperm.xlu0 %198, %v26
    %v200 = vpop.permute.xlu0 %199
    %vm201 = vcmp.eq.s32.totalorder %v200, %v36
    %v202 = vsel %vm201, %v173, 0.0
    %v203 = vadd.f32 %v197, %v202
    %204 = vset.pattern.permute.xlu0 21
    %205 = vperm.xlu0 %204, %v26
    %v206 = vpop.permute.xlu0 %205
    %vm207 = vcmp.eq.s32.totalorder %v206, %v36
    %v208 = vsel %vm207, %v173, 0.0
    %v209 = vadd.f32 %v203, %v208
    %210 = vset.pattern.permute.xlu0 22
    %211 = vperm.xlu0 %210, %v26
    %v212 = vpop.permute.xlu0 %211
    %vm213 = vcmp.eq.s32.totalorder %v212, %v36
    %v214 = vsel %vm213, %v173, 0.0
    %v215 = vadd.f32 %v209, %v214
    %216 = vset.pattern.permute.xlu0 23
    %217 = vperm.xlu0 %216, %v26
    %v218 = vpop.permute.xlu0 %217
    %vm219 = vcmp.eq.s32.totalorder %v218, %v36
    %v220 = vsel %vm219, %v173, 0.0
    %v221 = vadd.f32 %v215, %v220
    %vm222 = vcmask 523264
    %v224 = vsel %vm222, %v221, 0
    %226 = vmatprep.subr.mxu0 0.0
    %v227 = vand.u32 %v27, 4294901760
    %228 = vmatpush1.msra.mxu0 %v227
    %229 = vmatprep.subr.mxu0 0.0
    %v230 = vand.u32 %v28, 4294901760
    %231 = vmatpush1.msra.mxu0 %v230
    %232 = vmatprep.subr.mxu0 0.0
    %v233 = vand.u32 %v29, 4294901760
    %234 = vmatpush1.msra.mxu0 %v233
    %235 = vmatprep.subr.mxu0 0.0
    %v236 = vand.u32 %v30, 4294901760
    %237 = vmatpush1.msra.mxu0 %v236
    %238 = vmatprep.subr.mxu0 0.0
    %v239 = vand.u32 %v31, 4294901760
    %240 = vmatpush1.msra.mxu0 %v239
    %241 = vmatprep.subr.mxu0 0.0
    %v242 = vand.u32 %v32, 4294901760
    %243 = vmatpush1.msra.mxu0 %v242
    %244 = vmatprep.subr.mxu0 0.0
    %v245 = vand.u32 %v33, 4294901760
    %246 = vmatpush1.msra.mxu0 %v245
    %247 = vmatprep.subr.mxu0 0.0
    %v248 = vand.u32 %v34, 4294901760
    %249 = vmatpush1.msra.mxu0 %v248
    %250 = vmatprep.subr.mxu0 0.0
    %251 = vmatpush1.msra.mxu0 0.0
    %252 = vmatprep.subr.mxu0 0.0
    %253 = vmatpush1.msra.mxu0 0.0
    %254 = vmatprep.subr.mxu0 0.0
    %255 = vmatpush1.msra.mxu0 0.0
    %256 = vmatprep.subr.mxu0 0.0
    %257 = vmatpush1.msra.mxu0 0.0
    %258 = vmatprep.subr.mxu0 0.0
    %259 = vmatpush1.msra.mxu0 0.0
    %260 = vmatprep.subr.mxu0 0.0
    %261 = vmatpush1.msra.mxu0 0.0
    %262 = vmatprep.subr.mxu0 0.0
    %263 = vmatpush1.msra.mxu0 0.0
    %264 = vmatprep.subr.mxu0 0.0
    %265 = vmatpush1.msra.mxu0 0.0
    %266 = vmatprep.subr.mxu0 0.0
    %267 = vmatpush1.msra.mxu0 0.0
    %268 = vmatprep.subr.mxu0 0.0
    %269 = vmatpush1.msra.mxu0 0.0
    %270 = vmatprep.subr.mxu0 0.0
    %271 = vmatpush1.msra.mxu0 0.0
    %272 = vmatprep.subr.mxu0 0.0
    %273 = vmatpush1.msra.mxu0 0.0
    %274 = vmatprep.subr.mxu0 0.0
    %275 = vmatpush1.msra.mxu0 0.0
    %276 = vmatprep.subr.mxu0 0.0
    %277 = vmatpush1.msra.mxu0 0.0
    %278 = vmatprep.subr.mxu0 0.0
    %279 = vmatpush1.msra.mxu0 0.0
    %280 = vmatprep.subr.mxu0 0.0
    %281 = vmatpush1.msra.mxu0 0.0
    %282 = vmatprep.subr.mxu0 0.0
    %283 = vmatpush1.msra.mxu0 0.0
    %284 = vmatprep.subr.mxu0 0.0
    %285 = vmatpush1.msra.mxu0 0.0
    %286 = vmatprep.subr.mxu0 0.0
    %287 = vmatpush1.msra.mxu0 0.0
    %288 = vmatprep.subr.mxu0 0.0
    %289 = vmatpush1.msra.mxu0 0.0
    %290 = vmatprep.subr.mxu0 0.0
    %291 = vmatpush1.msra.mxu0 0.0
    %292 = vmatprep.subr.mxu0 0.0
    %293 = vmatpush1.msra.mxu0 0.0
    %294 = vmatprep.subr.mxu0 0.0
    %295 = vmatpush1.msra.mxu0 0.0
    %296 = vmatprep.subr.mxu0 0.0
    %297 = vmatpush1.msra.mxu0 0.0
    %298 = vmatprep.mubr.f32.mxu0 0.0
    %v299 = vand.u32 %v224, 4294901760
    %v300 = vsub.f32 %v224, %v299
    %v301 = vand.u32 %v300, 4294901760
    %v302 = vsub.f32 %v300, %v301
    %v303 = vand.u32 %v302, 4294901760
    %304 = vmatmul.mubr.f32.gmra.mrb[0].mxu0 %v303
    %v305 = vpop.f32.mrb[0].mxu0
    %v306 = vadd.f32 0.0, %v305
    %v307 = vpop.f32.mrb[0].mxu0
    %308 = vdwg.mxu0
    %309 = vmatprep.subr.mxu0 0.0
    %v310 = vand.u32 %v27, 4294901760
    %v311 = vsub.f32 %v27, %v310
    %v312 = vand.u32 %v311, 4294901760
    %v313 = vsub.f32 %v311, %v312
    %v314 = vand.u32 %v313, 4294901760
    %315 = vmatpush1.msra.mxu0 %v314
    %316 = vmatprep.subr.mxu0 0.0
    %v317 = vand.u32 %v28, 4294901760
    %v318 = vsub.f32 %v28, %v317
    %v319 = vand.u32 %v318, 4294901760
    %v320 = vsub.f32 %v318, %v319
    %v321 = vand.u32 %v320, 4294901760
    %322 = vmatpush1.msra.mxu0 %v321
    %323 = vmatprep.subr.mxu0 0.0
    %v324 = vand.u32 %v29, 4294901760
    %v325 = vsub.f32 %v29, %v324
    %v326 = vand.u32 %v325, 4294901760
    %v327 = vsub.f32 %v325, %v326
    %v328 = vand.u32 %v327, 4294901760
    %329 = vmatpush1.msra.mxu0 %v328
    %330 = vmatprep.subr.mxu0 0.0
    %v331 = vand.u32 %v30, 4294901760
    %v332 = vsub.f32 %v30, %v331
    %v333 = vand.u32 %v332, 4294901760
    %v334 = vsub.f32 %v332, %v333
    %v335 = vand.u32 %v334, 4294901760
    %336 = vmatpush1.msra.mxu0 %v335
    %337 = vmatprep.subr.mxu0 0.0
    %v338 = vand.u32 %v31, 4294901760
    %v339 = vsub.f32 %v31, %v338
    %v340 = vand.u32 %v339, 4294901760
    %v341 = vsub.f32 %v339, %v340
    %v342 = vand.u32 %v341, 4294901760
    %343 = vmatpush1.msra.mxu0 %v342
    %344 = vmatprep.subr.mxu0 0.0
    %v345 = vand.u32 %v32, 4294901760
    %v346 = vsub.f32 %v32, %v345
    %v347 = vand.u32 %v346, 4294901760
    %v348 = vsub.f32 %v346, %v347
    %v349 = vand.u32 %v348, 4294901760
    %350 = vmatpush1.msra.mxu0 %v349
    %351 = vmatprep.subr.mxu0 0.0
    %v352 = vand.u32 %v33, 4294901760
    %v353 = vsub.f32 %v33, %v352
    %v354 = vand.u32 %v353, 4294901760
    %v355 = vsub.f32 %v353, %v354
    %v356 = vand.u32 %v355, 4294901760
    %357 = vmatpush1.msra.mxu0 %v356
    %358 = vmatprep.subr.mxu0 0.0
    %v359 = vand.u32 %v34, 4294901760
    %v360 = vsub.f32 %v34, %v359
    %v361 = vand.u32 %v360, 4294901760
    %v362 = vsub.f32 %v360, %v361
    %v363 = vand.u32 %v362, 4294901760
    %364 = vmatpush1.msra.mxu0 %v363
    %365 = vmatprep.subr.mxu0 0.0
    %366 = vmatpush1.msra.mxu0 0.0
    %367 = vmatprep.subr.mxu0 0.0
    %368 = vmatpush1.msra.mxu0 0.0
    %369 = vmatprep.subr.mxu0 0.0
    %370 = vmatpush1.msra.mxu0 0.0
    %371 = vmatprep.subr.mxu0 0.0
    %372 = vmatpush1.msra.mxu0 0.0
    %373 = vmatprep.subr.mxu0 0.0
    %374 = vmatpush1.msra.mxu0 0.0
    %375 = vmatprep.subr.mxu0 0.0
    %376 = vmatpush1.msra.mxu0 0.0
    %377 = vmatprep.subr.mxu0 0.0
    %378 = vmatpush1.msra.mxu0 0.0
    %379 = vmatprep.subr.mxu0 0.0
    %380 = vmatpush1.msra.mxu0 0.0
    %381 = vmatprep.subr.mxu0 0.0
    %382 = vmatpush1.msra.mxu0 0.0
    %383 = vmatprep.subr.mxu0 0.0
    %384 = vmatpush1.msra.mxu0 0.0
    %385 = vmatprep.subr.mxu0 0.0
    %386 = vmatpush1.msra.mxu0 0.0
    %387 = vmatprep.subr.mxu0 0.0
    %388 = vmatpush1.msra.mxu0 0.0
    %389 = vmatprep.subr.mxu0 0.0
    %390 = vmatpush1.msra.mxu0 0.0
    %391 = vmatprep.subr.mxu0 0.0
    %392 = vmatpush1.msra.mxu0 0.0
    %393 = vmatprep.subr.mxu0 0.0
    %394 = vmatpush1.msra.mxu0 0.0
    %395 = vmatprep.subr.mxu0 0.0
    %396 = vmatpush1.msra.mxu0 0.0
    %397 = vmatprep.subr.mxu0 0.0
    %398 = vmatpush1.msra.mxu0 0.0
    %399 = vmatprep.subr.mxu0 0.0
    %400 = vmatpush1.msra.mxu0 0.0
    %401 = vmatprep.subr.mxu0 0.0
    %402 = vmatpush1.msra.mxu0 0.0
    %403 = vmatprep.subr.mxu0 0.0
    %404 = vmatpush1.msra.mxu0 0.0
    %405 = vmatprep.subr.mxu0 0.0
    %406 = vmatpush1.msra.mxu0 0.0
    %407 = vmatprep.subr.mxu0 0.0
    %408 = vmatpush1.msra.mxu0 0.0
    %409 = vmatprep.subr.mxu0 0.0
    %410 = vmatpush1.msra.mxu0 0.0
    %411 = vmatprep.subr.mxu0 0.0
    %412 = vmatpush1.msra.mxu0 0.0
    %413 = vmatprep.mubr.f32.mxu0 0.0
    %v414 = vand.u32 %v224, 4294901760
    %415 = vmatmul.mubr.f32.gmra.mrb[0].mxu0 %v414
    %v416 = vpop.f32.mrb[0].mxu0
    %v417 = vadd.f32 %v306, %v416
    %v418 = vpop.f32.mrb[0].mxu0
    %419 = vdwg.mxu0
    %420 = vmatprep.subr.mxu0 0.0
    %v421 = vand.u32 %v27, 4294901760
    %v422 = vsub.f32 %v27, %v421
    %423 = vmatpush1.msra.mxu0 %v422
    %424 = vmatprep.subr.mxu0 0.0
    %v425 = vand.u32 %v28, 4294901760
    %v426 = vsub.f32 %v28, %v425
    %427 = vmatpush1.msra.mxu0 %v426
    %428 = vmatprep.subr.mxu0 0.0
    %v429 = vand.u32 %v29, 4294901760
    %v430 = vsub.f32 %v29, %v429
    %431 = vmatpush1.msra.mxu0 %v430
    %432 = vmatprep.subr.mxu0 0.0
    %v433 = vand.u32 %v30, 4294901760
    %v434 = vsub.f32 %v30, %v433
    %435 = vmatpush1.msra.mxu0 %v434
    %436 = vmatprep.subr.mxu0 0.0
    %v437 = vand.u32 %v31, 4294901760
    %v438 = vsub.f32 %v31, %v437
    %439 = vmatpush1.msra.mxu0 %v438
    %440 = vmatprep.subr.mxu0 0.0
    %v441 = vand.u32 %v32, 4294901760
    %v442 = vsub.f32 %v32, %v441
    %443 = vmatpush1.msra.mxu0 %v442
    %444 = vmatprep.subr.mxu0 0.0
    %v445 = vand.u32 %v33, 4294901760
    %v446 = vsub.f32 %v33, %v445
    %447 = vmatpush1.msra.mxu0 %v446
    %448 = vmatprep.subr.mxu0 0.0
    %v449 = vand.u32 %v34, 4294901760
    %v450 = vsub.f32 %v34, %v449
    %451 = vmatpush1.msra.mxu0 %v450
    %452 = vmatprep.subr.mxu0 0.0
    %453 = vmatpush1.msra.mxu0 0.0
    %454 = vmatprep.subr.mxu0 0.0
    %455 = vmatpush1.msra.mxu0 0.0
    %456 = vmatprep.subr.mxu0 0.0
    %457 = vmatpush1.msra.mxu0 0.0
    %458 = vmatprep.subr.mxu0 0.0
    %459 = vmatpush1.msra.mxu0 0.0
    %460 = vmatprep.subr.mxu0 0.0
    %461 = vmatpush1.msra.mxu0 0.0
    %462 = vmatprep.subr.mxu0 0.0
    %463 = vmatpush1.msra.mxu0 0.0
    %464 = vmatprep.subr.mxu0 0.0
    %465 = vmatpush1.msra.mxu0 0.0
    %466 = vmatprep.subr.mxu0 0.0
    %467 = vmatpush1.msra.mxu0 0.0
    %468 = vmatprep.subr.mxu0 0.0
    %469 = vmatpush1.msra.mxu0 0.0
    %470 = vmatprep.subr.mxu0 0.0
    %471 = vmatpush1.msra.mxu0 0.0
    %472 = vmatprep.subr.mxu0 0.0
    %473 = vmatpush1.msra.mxu0 0.0
    %474 = vmatprep.subr.mxu0 0.0
    %475 = vmatpush1.msra.mxu0 0.0
    %476 = vmatprep.subr.mxu0 0.0
    %477 = vmatpush1.msra.mxu0 0.0
    %478 = vmatprep.subr.mxu0 0.0
    %479 = vmatpush1.msra.mxu0 0.0
    %480 = vmatprep.subr.mxu0 0.0
    %481 = vmatpush1.msra.mxu0 0.0
    %482 = vmatprep.subr.mxu0 0.0
    %483 = vmatpush1.msra.mxu0 0.0
    %484 = vmatprep.subr.mxu0 0.0
    %485 = vmatpush1.msra.mxu0 0.0
    %486 = vmatprep.subr.mxu0 0.0
    %487 = vmatpush1.msra.mxu0 0.0
    %488 = vmatprep.subr.mxu0 0.0
    %489 = vmatpush1.msra.mxu0 0.0
    %490 = vmatprep.subr.mxu0 0.0
    %491 = vmatpush1.msra.mxu0 0.0
    %492 = vmatprep.subr.mxu0 0.0
    %493 = vmatpush1.msra.mxu0 0.0
    %494 = vmatprep.subr.mxu0 0.0
    %495 = vmatpush1.msra.mxu0 0.0
    %496 = vmatprep.subr.mxu0 0.0
    %497 = vmatpush1.msra.mxu0 0.0
    %498 = vmatprep.subr.mxu0 0.0
    %499 = vmatpush1.msra.mxu0 0.0
    %500 = vmatprep.mubr.f32.mxu0 0.0
    %v501 = vand.u32 %v224, 4294901760
    %v502 = vsub.f32 %v224, %v501
    %503 = vmatmul.mubr.f32.gmra.mrb[0].mxu0 %v502
    %v504 = vpop.f32.mrb[0].mxu0
    %v505 = vadd.f32 %v417, %v504
    %v506 = vpop.f32.mrb[0].mxu0
    %507 = vdwg.mxu0
    %508 = vmatprep.subr.mxu0 0.0
    %v509 = vand.u32 %v27, 4294901760
    %510 = vmatpush1.msra.mxu0 %v509
    %511 = vmatprep.subr.mxu0 0.0
    %v512 = vand.u32 %v28, 4294901760
    %513 = vmatpush1.msra.mxu0 %v512
    %514 = vmatprep.subr.mxu0 0.0
    %v515 = vand.u32 %v29, 4294901760
    %516 = vmatpush1.msra.mxu0 %v515
    %517 = vmatprep.subr.mxu0 0.0
    %v518 = vand.u32 %v30, 4294901760
    %519 = vmatpush1.msra.mxu0 %v518
    %520 = vmatprep.subr.mxu0 0.0
    %v521 = vand.u32 %v31, 4294901760
    %522 = vmatpush1.msra.mxu0 %v521
    %523 = vmatprep.subr.mxu0 0.0
    %v524 = vand.u32 %v32, 4294901760
    %525 = vmatpush1.msra.mxu0 %v524
    %526 = vmatprep.subr.mxu0 0.0
    %v527 = vand.u32 %v33, 4294901760
    %528 = vmatpush1.msra.mxu0 %v527
    %529 = vmatprep.subr.mxu0 0.0
    %v530 = vand.u32 %v34, 4294901760
    %531 = vmatpush1.msra.mxu0 %v530
    %532 = vmatprep.subr.mxu0 0.0
    %533 = vmatpush1.msra.mxu0 0.0
    %534 = vmatprep.subr.mxu0 0.0
    %535 = vmatpush1.msra.mxu0 0.0
    %536 = vmatprep.subr.mxu0 0.0
    %537 = vmatpush1.msra.mxu0 0.0
    %538 = vmatprep.subr.mxu0 0.0
    %539 = vmatpush1.msra.mxu0 0.0
    %540 = vmatprep.subr.mxu0 0.0
    %541 = vmatpush1.msra.mxu0 0.0
    %542 = vmatprep.subr.mxu0 0.0
    %543 = vmatpush1.msra.mxu0 0.0
    %544 = vmatprep.subr.mxu0 0.0
    %545 = vmatpush1.msra.mxu0 0.0
    %546 = vmatprep.subr.mxu0 0.0
    %547 = vmatpush1.msra.mxu0 0.0
    %548 = vmatprep.subr.mxu0 0.0
    %549 = vmatpush1.msra.mxu0 0.0
    %550 = vmatprep.subr.mxu0 0.0
    %551 = vmatpush1.msra.mxu0 0.0
    %552 = vmatprep.subr.mxu0 0.0
    %553 = vmatpush1.msra.mxu0 0.0
    %554 = vmatprep.subr.mxu0 0.0
    %555 = vmatpush1.msra.mxu0 0.0
    %556 = vmatprep.subr.mxu0 0.0
    %557 = vmatpush1.msra.mxu0 0.0
    %558 = vmatprep.subr.mxu0 0.0
    %559 = vmatpush1.msra.mxu0 0.0
    %560 = vmatprep.subr.mxu0 0.0
    %561 = vmatpush1.msra.mxu0 0.0
    %562 = vmatprep.subr.mxu0 0.0
    %563 = vmatpush1.msra.mxu0 0.0
    %564 = vmatprep.subr.mxu0 0.0
    %565 = vmatpush1.msra.mxu0 0.0
    %566 = vmatprep.subr.mxu0 0.0
    %567 = vmatpush1.msra.mxu0 0.0
    %568 = vmatprep.subr.mxu0 0.0
    %569 = vmatpush1.msra.mxu0 0.0
    %570 = vmatprep.subr.mxu0 0.0
    %571 = vmatpush1.msra.mxu0 0.0
    %572 = vmatprep.subr.mxu0 0.0
    %573 = vmatpush1.msra.mxu0 0.0
    %574 = vmatprep.subr.mxu0 0.0
    %575 = vmatpush1.msra.mxu0 0.0
    %576 = vmatprep.subr.mxu0 0.0
    %577 = vmatpush1.msra.mxu0 0.0
    %578 = vmatprep.subr.mxu0 0.0
    %579 = vmatpush1.msra.mxu0 0.0
    %580 = vmatprep.mubr.f32.mxu0 0.0
    %v581 = vand.u32 %v224, 4294901760
    %v582 = vsub.f32 %v224, %v581
    %v583 = vand.u32 %v582, 4294901760
    %584 = vmatmul.mubr.f32.gmra.mrb[0].mxu0 %v583
    %v585 = vpop.f32.mrb[0].mxu0
    %v586 = vadd.f32 %v505, %v585
    %v587 = vpop.f32.mrb[0].mxu0
    %588 = vdwg.mxu0
    %589 = vmatprep.subr.mxu0 0.0
    %v590 = vand.u32 %v27, 4294901760
    %v591 = vsub.f32 %v27, %v590
    %v592 = vand.u32 %v591, 4294901760
    %593 = vmatpush1.msra.mxu0 %v592
    %594 = vmatprep.subr.mxu0 0.0
    %v595 = vand.u32 %v28, 4294901760
    %v596 = vsub.f32 %v28, %v595
    %v597 = vand.u32 %v596, 4294901760
    %598 = vmatpush1.msra.mxu0 %v597
    %599 = vmatprep.subr.mxu0 0.0
    %v600 = vand.u32 %v29, 4294901760
    %v601 = vsub.f32 %v29, %v600
    %v602 = vand.u32 %v601, 4294901760
    %603 = vmatpush1.msra.mxu0 %v602
    %604 = vmatprep.subr.mxu0 0.0
    %v605 = vand.u32 %v30, 4294901760
    %v606 = vsub.f32 %v30, %v605
    %v607 = vand.u32 %v606, 4294901760
    %608 = vmatpush1.msra.mxu0 %v607
    %609 = vmatprep.subr.mxu0 0.0
    %v610 = vand.u32 %v31, 4294901760
    %v611 = vsub.f32 %v31, %v610
    %v612 = vand.u32 %v611, 4294901760
    %613 = vmatpush1.msra.mxu0 %v612
    %614 = vmatprep.subr.mxu0 0.0
    %v615 = vand.u32 %v32, 4294901760
    %v616 = vsub.f32 %v32, %v615
    %v617 = vand.u32 %v616, 4294901760
    %618 = vmatpush1.msra.mxu0 %v617
    %619 = vmatprep.subr.mxu0 0.0
    %v620 = vand.u32 %v33, 4294901760
    %v621 = vsub.f32 %v33, %v620
    %v622 = vand.u32 %v621, 4294901760
    %623 = vmatpush1.msra.mxu0 %v622
    %624 = vmatprep.subr.mxu0 0.0
    %v625 = vand.u32 %v34, 4294901760
    %v626 = vsub.f32 %v34, %v625
    %v627 = vand.u32 %v626, 4294901760
    %628 = vmatpush1.msra.mxu0 %v627
    %629 = vmatprep.subr.mxu0 0.0
    %630 = vmatpush1.msra.mxu0 0.0
    %631 = vmatprep.subr.mxu0 0.0
    %632 = vmatpush1.msra.mxu0 0.0
    %633 = vmatprep.subr.mxu0 0.0
    %634 = vmatpush1.msra.mxu0 0.0
    %635 = vmatprep.subr.mxu0 0.0
    %636 = vmatpush1.msra.mxu0 0.0
    %637 = vmatprep.subr.mxu0 0.0
    %638 = vmatpush1.msra.mxu0 0.0
    %639 = vmatprep.subr.mxu0 0.0
    %640 = vmatpush1.msra.mxu0 0.0
    %641 = vmatprep.subr.mxu0 0.0
    %642 = vmatpush1.msra.mxu0 0.0
    %643 = vmatprep.subr.mxu0 0.0
    %644 = vmatpush1.msra.mxu0 0.0
    %645 = vmatprep.subr.mxu0 0.0
    %646 = vmatpush1.msra.mxu0 0.0
    %647 = vmatprep.subr.mxu0 0.0
    %648 = vmatpush1.msra.mxu0 0.0
    %649 = vmatprep.subr.mxu0 0.0
    %650 = vmatpush1.msra.mxu0 0.0
    %651 = vmatprep.subr.mxu0 0.0
    %652 = vmatpush1.msra.mxu0 0.0
    %653 = vmatprep.subr.mxu0 0.0
    %654 = vmatpush1.msra.mxu0 0.0
    %655 = vmatprep.subr.mxu0 0.0
    %656 = vmatpush1.msra.mxu0 0.0
    %657 = vmatprep.subr.mxu0 0.0
    %658 = vmatpush1.msra.mxu0 0.0
    %659 = vmatprep.subr.mxu0 0.0
    %660 = vmatpush1.msra.mxu0 0.0
    %661 = vmatprep.subr.mxu0 0.0
    %662 = vmatpush1.msra.mxu0 0.0
    %663 = vmatprep.subr.mxu0 0.0
    %664 = vmatpush1.msra.mxu0 0.0
    %665 = vmatprep.subr.mxu0 0.0
    %666 = vmatpush1.msra.mxu0 0.0
    %667 = vmatprep.subr.mxu0 0.0
    %668 = vmatpush1.msra.mxu0 0.0
    %669 = vmatprep.subr.mxu0 0.0
    %670 = vmatpush1.msra.mxu0 0.0
    %671 = vmatprep.subr.mxu0 0.0
    %672 = vmatpush1.msra.mxu0 0.0
    %673 = vmatprep.subr.mxu0 0.0
    %674 = vmatpush1.msra.mxu0 0.0
    %675 = vmatprep.subr.mxu0 0.0
    %676 = vmatpush1.msra.mxu0 0.0
    %677 = vmatprep.mubr.f32.mxu0 0.0
    %v678 = vand.u32 %v224, 4294901760
    %679 = vmatmul.mubr.f32.gmra.mrb[0].mxu0 %v678
    %v680 = vpop.f32.mrb[0].mxu0
    %v681 = vadd.f32 %v586, %v680
    %v682 = vpop.f32.mrb[0].mxu0
    %683 = vdwg.mxu0
    %684 = vmatprep.subr.mxu0 0.0
    %v685 = vand.u32 %v27, 4294901760
    %686 = vmatpush1.msra.mxu0 %v685
    %687 = vmatprep.subr.mxu0 0.0
    %v688 = vand.u32 %v28, 4294901760
    %689 = vmatpush1.msra.mxu0 %v688
    %690 = vmatprep.subr.mxu0 0.0
    %v691 = vand.u32 %v29, 4294901760
    %692 = vmatpush1.msra.mxu0 %v691
    %693 = vmatprep.subr.mxu0 0.0
    %v694 = vand.u32 %v30, 4294901760
    %695 = vmatpush1.msra.mxu0 %v694
    %696 = vmatprep.subr.mxu0 0.0
    %v697 = vand.u32 %v31, 4294901760
    %698 = vmatpush1.msra.mxu0 %v697
    %699 = vmatprep.subr.mxu0 0.0
    %v700 = vand.u32 %v32, 4294901760
    %701 = vmatpush1.msra.mxu0 %v700
    %702 = vmatprep.subr.mxu0 0.0
    %v703 = vand.u32 %v33, 4294901760
    %704 = vmatpush1.msra.mxu0 %v703
    %705 = vmatprep.subr.mxu0 0.0
    %v706 = vand.u32 %v34, 4294901760
    %707 = vmatpush1.msra.mxu0 %v706
    %708 = vmatprep.subr.mxu0 0.0
    %709 = vmatpush1.msra.mxu0 0.0
    %710 = vmatprep.subr.mxu0 0.0
    %711 = vmatpush1.msra.mxu0 0.0
    %712 = vmatprep.subr.mxu0 0.0
    %713 = vmatpush1.msra.mxu0 0.0
    %714 = vmatprep.subr.mxu0 0.0
    %715 = vmatpush1.msra.mxu0 0.0
    %716 = vmatprep.subr.mxu0 0.0
    %717 = vmatpush1.msra.mxu0 0.0
    %718 = vmatprep.subr.mxu0 0.0
    %719 = vmatpush1.msra.mxu0 0.0
    %720 = vmatprep.subr.mxu0 0.0
    %721 = vmatpush1.msra.mxu0 0.0
    %722 = vmatprep.subr.mxu0 0.0
    %723 = vmatpush1.msra.mxu0 0.0
    %724 = vmatprep.subr.mxu0 0.0
    %725 = vmatpush1.msra.mxu0 0.0
    %726 = vmatprep.subr.mxu0 0.0
    %727 = vmatpush1.msra.mxu0 0.0
    %728 = vmatprep.subr.mxu0 0.0
    %729 = vmatpush1.msra.mxu0 0.0
    %730 = vmatprep.subr.mxu0 0.0
    %731 = vmatpush1.msra.mxu0 0.0
    %732 = vmatprep.subr.mxu0 0.0
    %733 = vmatpush1.msra.mxu0 0.0
    %734 = vmatprep.subr.mxu0 0.0
    %735 = vmatpush1.msra.mxu0 0.0
    %736 = vmatprep.subr.mxu0 0.0
    %737 = vmatpush1.msra.mxu0 0.0
    %738 = vmatprep.subr.mxu0 0.0
    %739 = vmatpush1.msra.mxu0 0.0
    %740 = vmatprep.subr.mxu0 0.0
    %741 = vmatpush1.msra.mxu0 0.0
    %742 = vmatprep.subr.mxu0 0.0
    %743 = vmatpush1.msra.mxu0 0.0
    %744 = vmatprep.subr.mxu0 0.0
    %745 = vmatpush1.msra.mxu0 0.0
    %746 = vmatprep.subr.mxu0 0.0
    %747 = vmatpush1.msra.mxu0 0.0
    %748 = vmatprep.subr.mxu0 0.0
    %749 = vmatpush1.msra.mxu0 0.0
    %750 = vmatprep.subr.mxu0 0.0
    %751 = vmatpush1.msra.mxu0 0.0
    %752 = vmatprep.subr.mxu0 0.0
    %753 = vmatpush1.msra.mxu0 0.0
    %754 = vmatprep.subr.mxu0 0.0
    %755 = vmatpush1.msra.mxu0 0.0
    %756 = vmatprep.mubr.f32.mxu0 0.0
    %v757 = vand.u32 %v224, 4294901760
    %758 = vmatmul.mubr.f32.gmra.mrb[0].mxu0 %v757
    %v759 = vpop.f32.mrb[0].mxu0
    %v760 = vadd.f32 %v681, %v759
    %v761 = vpop.f32.mrb[0].mxu0
    %762 = vdwg.mxu0
    %v763 = vrcp.pop %v170
    %v764 = vmul.f32 %v760, %v763
    %766 = vset.pattern.permute.xlu0 0
    %767 = vperm.xlu0 %766, %v25
    %v768 = vpop.permute.xlu0 %767
    %v770 = vmul.f32 %v768, %v21
    %771 = vset.pattern.permute.xlu0 1
    %772 = vperm.xlu0 %771, %v25
    %v773 = vpop.permute.xlu0 %772
    %v775 = vmul.f32 %v773, %v764
    %v776 = vadd.f32 %v770, %v775
    %777 = vrot.lane.b32.xlu0 %v25, 127
    %v778 = vpop.permute.xlu0 %777
    %v780 = vadd.f32 %v25, %v778
    %782 = vset.pattern.permute.xlu0 0
    %783 = vperm.xlu0 %782, %v780
    %v784 = vpop.permute.xlu0 %783
    %v786 = vrcp.pop %v784
    %v787 = vmul.f32 %v776, %v786
    %v788 = vmul.f32 %v787, %v22
    %vm789 = vcmask 261120
    %v791 = vsel %vm789, 1.0, 0
    %v794 = vsel %vm789, %v788, 0
    %796 = vmatprep.subr.mxu0 0.0
    %v797 = vand.u32 %v794, 4294901760
    %798 = vmatpush1.xpose.msra.mxu0 %v797
    %799 = vmatprep.subr.mxu0 0.0
    %800 = vmatpush1.xpose.msra.mxu0 0.0
    %801 = vmatprep.subr.mxu0 0.0
    %802 = vmatpush1.xpose.msra.mxu0 0.0
    %803 = vmatprep.subr.mxu0 0.0
    %804 = vmatpush1.xpose.msra.mxu0 0.0
    %805 = vmatprep.subr.mxu0 0.0
    %806 = vmatpush1.xpose.msra.mxu0 0.0
    %807 = vmatprep.subr.mxu0 0.0
    %808 = vmatpush1.xpose.msra.mxu0 0.0
    %809 = vmatprep.subr.mxu0 0.0
    %810 = vmatpush1.xpose.msra.mxu0 0.0
    %811 = vmatprep.subr.mxu0 0.0
    %812 = vmatpush1.xpose.msra.mxu0 0.0
    %813 = vmatprep.subr.mxu0 0.0
    %814 = vmatpush1.xpose.msra.mxu0 0.0
    %815 = vmatprep.subr.mxu0 0.0
    %816 = vmatpush1.xpose.msra.mxu0 0.0
    %817 = vmatprep.subr.mxu0 0.0
    %818 = vmatpush1.xpose.msra.mxu0 0.0
    %819 = vmatprep.subr.mxu0 0.0
    %820 = vmatpush1.xpose.msra.mxu0 0.0
    %821 = vmatprep.subr.mxu0 0.0
    %822 = vmatpush1.xpose.msra.mxu0 0.0
    %823 = vmatprep.subr.mxu0 0.0
    %824 = vmatpush1.xpose.msra.mxu0 0.0
    %825 = vmatprep.subr.mxu0 0.0
    %826 = vmatpush1.xpose.msra.mxu0 0.0
    %827 = vmatprep.subr.mxu0 0.0
    %828 = vmatpush1.xpose.msra.mxu0 0.0
    %829 = vmatprep.subr.mxu0 0.0
    %830 = vmatpush1.xpose.msra.mxu0 0.0
    %831 = vmatprep.subr.mxu0 0.0
    %832 = vmatpush1.xpose.msra.mxu0 0.0
    %833 = vmatprep.subr.mxu0 0.0
    %834 = vmatpush1.xpose.msra.mxu0 0.0
    %835 = vmatprep.subr.mxu0 0.0
    %836 = vmatpush1.xpose.msra.mxu0 0.0
    %837 = vmatprep.subr.mxu0 0.0
    %838 = vmatpush1.xpose.msra.mxu0 0.0
    %839 = vmatprep.subr.mxu0 0.0
    %840 = vmatpush1.xpose.msra.mxu0 0.0
    %841 = vmatprep.subr.mxu0 0.0
    %842 = vmatpush1.xpose.msra.mxu0 0.0
    %843 = vmatprep.subr.mxu0 0.0
    %844 = vmatpush1.xpose.msra.mxu0 0.0
    %845 = vmatprep.subr.mxu0 0.0
    %846 = vmatpush1.xpose.msra.mxu0 0.0
    %847 = vmatprep.subr.mxu0 0.0
    %848 = vmatpush1.xpose.msra.mxu0 0.0
    %849 = vmatprep.subr.mxu0 0.0
    %850 = vmatpush1.xpose.msra.mxu0 0.0
    %851 = vmatprep.subr.mxu0 0.0
    %852 = vmatpush1.xpose.msra.mxu0 0.0
    %853 = vmatprep.subr.mxu0 0.0
    %854 = vmatpush1.xpose.msra.mxu0 0.0
    %855 = vmatprep.subr.mxu0 0.0
    %856 = vmatpush1.xpose.msra.mxu0 0.0
    %857 = vmatprep.subr.mxu0 0.0
    %858 = vmatpush1.xpose.msra.mxu0 0.0
    %859 = vmatprep.subr.mxu0 0.0
    %860 = vmatpush1.xpose.msra.mxu0 0.0
    %861 = vmatprep.mubr.f32.mxu0 0.0
    %v862 = vand.u32 %v791, 4294901760
    %v863 = vsub.f32 %v791, %v862
    %v864 = vand.u32 %v863, 4294901760
    %v865 = vsub.f32 %v863, %v864
    %v866 = vand.u32 %v865, 4294901760
    %867 = vmatmul.mubr.f32.gmra.mrb[0].mxu0 %v866
    %v868 = vpop.f32.mrb[0].mxu0
    %v869 = vadd.f32 0.0, %v868
    %v870 = vpop.f32.mrb[0].mxu0
    %871 = vdwg.mxu0
    %872 = vmatprep.subr.mxu0 0.0
    %v873 = vand.u32 %v794, 4294901760
    %v874 = vsub.f32 %v794, %v873
    %v875 = vand.u32 %v874, 4294901760
    %v876 = vsub.f32 %v874, %v875
    %v877 = vand.u32 %v876, 4294901760
    %878 = vmatpush1.xpose.msra.mxu0 %v877
    %879 = vmatprep.subr.mxu0 0.0
    %880 = vmatpush1.xpose.msra.mxu0 0.0
    %881 = vmatprep.subr.mxu0 0.0
    %882 = vmatpush1.xpose.msra.mxu0 0.0
    %883 = vmatprep.subr.mxu0 0.0
    %884 = vmatpush1.xpose.msra.mxu0 0.0
    %885 = vmatprep.subr.mxu0 0.0
    %886 = vmatpush1.xpose.msra.mxu0 0.0
    %887 = vmatprep.subr.mxu0 0.0
    %888 = vmatpush1.xpose.msra.mxu0 0.0
    %889 = vmatprep.subr.mxu0 0.0
    %890 = vmatpush1.xpose.msra.mxu0 0.0
    %891 = vmatprep.subr.mxu0 0.0
    %892 = vmatpush1.xpose.msra.mxu0 0.0
    %893 = vmatprep.subr.mxu0 0.0
    %894 = vmatpush1.xpose.msra.mxu0 0.0
    %895 = vmatprep.subr.mxu0 0.0
    %896 = vmatpush1.xpose.msra.mxu0 0.0
    %897 = vmatprep.subr.mxu0 0.0
    %898 = vmatpush1.xpose.msra.mxu0 0.0
    %899 = vmatprep.subr.mxu0 0.0
    %900 = vmatpush1.xpose.msra.mxu0 0.0
    %901 = vmatprep.subr.mxu0 0.0
    %902 = vmatpush1.xpose.msra.mxu0 0.0
    %903 = vmatprep.subr.mxu0 0.0
    %904 = vmatpush1.xpose.msra.mxu0 0.0
    %905 = vmatprep.subr.mxu0 0.0
    %906 = vmatpush1.xpose.msra.mxu0 0.0
    %907 = vmatprep.subr.mxu0 0.0
    %908 = vmatpush1.xpose.msra.mxu0 0.0
    %909 = vmatprep.subr.mxu0 0.0
    %910 = vmatpush1.xpose.msra.mxu0 0.0
    %911 = vmatprep.subr.mxu0 0.0
    %912 = vmatpush1.xpose.msra.mxu0 0.0
    %913 = vmatprep.subr.mxu0 0.0
    %914 = vmatpush1.xpose.msra.mxu0 0.0
    %915 = vmatprep.subr.mxu0 0.0
    %916 = vmatpush1.xpose.msra.mxu0 0.0
    %917 = vmatprep.subr.mxu0 0.0
    %918 = vmatpush1.xpose.msra.mxu0 0.0
    %919 = vmatprep.subr.mxu0 0.0
    %920 = vmatpush1.xpose.msra.mxu0 0.0
    %921 = vmatprep.subr.mxu0 0.0
    %922 = vmatpush1.xpose.msra.mxu0 0.0
    %923 = vmatprep.subr.mxu0 0.0
    %924 = vmatpush1.xpose.msra.mxu0 0.0
    %925 = vmatprep.subr.mxu0 0.0
    %926 = vmatpush1.xpose.msra.mxu0 0.0
    %927 = vmatprep.subr.mxu0 0.0
    %928 = vmatpush1.xpose.msra.mxu0 0.0
    %929 = vmatprep.subr.mxu0 0.0
    %930 = vmatpush1.xpose.msra.mxu0 0.0
    %931 = vmatprep.subr.mxu0 0.0
    %932 = vmatpush1.xpose.msra.mxu0 0.0
    %933 = vmatprep.subr.mxu0 0.0
    %934 = vmatpush1.xpose.msra.mxu0 0.0
    %935 = vmatprep.subr.mxu0 0.0
    %936 = vmatpush1.xpose.msra.mxu0 0.0
    %937 = vmatprep.subr.mxu0 0.0
    %938 = vmatpush1.xpose.msra.mxu0 0.0
    %939 = vmatprep.subr.mxu0 0.0
    %940 = vmatpush1.xpose.msra.mxu0 0.0
    %941 = vmatprep.mubr.f32.mxu0 0.0
    %v942 = vand.u32 %v791, 4294901760
    %943 = vmatmul.mubr.f32.gmra.mrb[0].mxu0 %v942
    %v944 = vpop.f32.mrb[0].mxu0
    %v945 = vadd.f32 %v869, %v944
    %v946 = vpop.f32.mrb[0].mxu0
    %947 = vdwg.mxu0
    %948 = vmatprep.subr.mxu0 0.0
    %v949 = vand.u32 %v794, 4294901760
    %v950 = vsub.f32 %v794, %v949
    %951 = vmatpush1.xpose.msra.mxu0 %v950
    %952 = vmatprep.subr.mxu0 0.0
    %953 = vmatpush1.xpose.msra.mxu0 0.0
    %954 = vmatprep.subr.mxu0 0.0
    %955 = vmatpush1.xpose.msra.mxu0 0.0
    %956 = vmatprep.subr.mxu0 0.0
    %957 = vmatpush1.xpose.msra.mxu0 0.0
    %958 = vmatprep.subr.mxu0 0.0
    %959 = vmatpush1.xpose.msra.mxu0 0.0
    %960 = vmatprep.subr.mxu0 0.0
    %961 = vmatpush1.xpose.msra.mxu0 0.0
    %962 = vmatprep.subr.mxu0 0.0
    %963 = vmatpush1.xpose.msra.mxu0 0.0
    %964 = vmatprep.subr.mxu0 0.0
    %965 = vmatpush1.xpose.msra.mxu0 0.0
    %966 = vmatprep.subr.mxu0 0.0
    %967 = vmatpush1.xpose.msra.mxu0 0.0
    %968 = vmatprep.subr.mxu0 0.0
    %969 = vmatpush1.xpose.msra.mxu0 0.0
    %970 = vmatprep.subr.mxu0 0.0
    %971 = vmatpush1.xpose.msra.mxu0 0.0
    %972 = vmatprep.subr.mxu0 0.0
    %973 = vmatpush1.xpose.msra.mxu0 0.0
    %974 = vmatprep.subr.mxu0 0.0
    %975 = vmatpush1.xpose.msra.mxu0 0.0
    %976 = vmatprep.subr.mxu0 0.0
    %977 = vmatpush1.xpose.msra.mxu0 0.0
    %978 = vmatprep.subr.mxu0 0.0
    %979 = vmatpush1.xpose.msra.mxu0 0.0
    %980 = vmatprep.subr.mxu0 0.0
    %981 = vmatpush1.xpose.msra.mxu0 0.0
    %982 = vmatprep.subr.mxu0 0.0
    %983 = vmatpush1.xpose.msra.mxu0 0.0
    %984 = vmatprep.subr.mxu0 0.0
    %985 = vmatpush1.xpose.msra.mxu0 0.0
    %986 = vmatprep.subr.mxu0 0.0
    %987 = vmatpush1.xpose.msra.mxu0 0.0
    %988 = vmatprep.subr.mxu0 0.0
    %989 = vmatpush1.xpose.msra.mxu0 0.0
    %990 = vmatprep.subr.mxu0 0.0
    %991 = vmatpush1.xpose.msra.mxu0 0.0
    %992 = vmatprep.subr.mxu0 0.0
    %993 = vmatpush1.xpose.msra.mxu0 0.0
    %994 = vmatprep.subr.mxu0 0.0
    %995 = vmatpush1.xpose.msra.mxu0 0.0
    %996 = vmatprep.subr.mxu0 0.0
    %997 = vmatpush1.xpose.msra.mxu0 0.0
    %998 = vmatprep.subr.mxu0 0.0
    %999 = vmatpush1.xpose.msra.mxu0 0.0
    %1000 = vmatprep.subr.mxu0 0.0
    %1001 = vmatpush1.xpose.msra.mxu0 0.0
    %1002 = vmatprep.subr.mxu0 0.0
    %1003 = vmatpush1.xpose.msra.mxu0 0.0
    %1004 = vmatprep.subr.mxu0 0.0
    %1005 = vmatpush1.xpose.msra.mxu0 0.0
    %1006 = vmatprep.subr.mxu0 0.0
    %1007 = vmatpush1.xpose.msra.mxu0 0.0
    %1008 = vmatprep.subr.mxu0 0.0
    %1009 = vmatpush1.xpose.msra.mxu0 0.0
    %1010 = vmatprep.subr.mxu0 0.0
    %1011 = vmatpush1.xpose.msra.mxu0 0.0
    %1012 = vmatprep.subr.mxu0 0.0
    %1013 = vmatpush1.xpose.msra.mxu0 0.0
    %1014 = vmatprep.mubr.f32.mxu0 0.0
    %v1015 = vand.u32 %v791, 4294901760
    %v1016 = vsub.f32 %v791, %v1015
    %1017 = vmatmul.mubr.f32.gmra.mrb[0].mxu0 %v1016
    %v1018 = vpop.f32.mrb[0].mxu0
    %v1019 = vadd.f32 %v945, %v1018
    %v1020 = vpop.f32.mrb[0].mxu0
    %1021 = vdwg.mxu0
    %1022 = vmatprep.subr.mxu0 0.0
    %v1023 = vand.u32 %v794, 4294901760
    %1024 = vmatpush1.xpose.msra.mxu0 %v1023
    %1025 = vmatprep.subr.mxu0 0.0
    %1026 = vmatpush1.xpose.msra.mxu0 0.0
    %1027 = vmatprep.subr.mxu0 0.0
    %1028 = vmatpush1.xpose.msra.mxu0 0.0
    %1029 = vmatprep.subr.mxu0 0.0
    %1030 = vmatpush1.xpose.msra.mxu0 0.0
    %1031 = vmatprep.subr.mxu0 0.0
    %1032 = vmatpush1.xpose.msra.mxu0 0.0
    %1033 = vmatprep.subr.mxu0 0.0
    %1034 = vmatpush1.xpose.msra.mxu0 0.0
    %1035 = vmatprep.subr.mxu0 0.0
    %1036 = vmatpush1.xpose.msra.mxu0 0.0
    %1037 = vmatprep.subr.mxu0 0.0
    %1038 = vmatpush1.xpose.msra.mxu0 0.0
    %1039 = vmatprep.subr.mxu0 0.0
    %1040 = vmatpush1.xpose.msra.mxu0 0.0
    %1041 = vmatprep.subr.mxu0 0.0
    %1042 = vmatpush1.xpose.msra.mxu0 0.0
    %1043 = vmatprep.subr.mxu0 0.0
    %1044 = vmatpush1.xpose.msra.mxu0 0.0
    %1045 = vmatprep.subr.mxu0 0.0
    %1046 = vmatpush1.xpose.msra.mxu0 0.0
    %1047 = vmatprep.subr.mxu0 0.0
    %1048 = vmatpush1.xpose.msra.mxu0 0.0
    %1049 = vmatprep.subr.mxu0 0.0
    %1050 = vmatpush1.xpose.msra.mxu0 0.0
    %1051 = vmatprep.subr.mxu0 0.0
    %1052 = vmatpush1.xpose.msra.mxu0 0.0
    %1053 = vmatprep.subr.mxu0 0.0
    %1054 = vmatpush1.xpose.msra.mxu0 0.0
    %1055 = vmatprep.subr.mxu0 0.0
    %1056 = vmatpush1.xpose.msra.mxu0 0.0
    %1057 = vmatprep.subr.mxu0 0.0
    %1058 = vmatpush1.xpose.msra.mxu0 0.0
    %1059 = vmatprep.subr.mxu0 0.0
    %1060 = vmatpush1.xpose.msra.mxu0 0.0
    %1061 = vmatprep.subr.mxu0 0.0
    %1062 = vmatpush1.xpose.msra.mxu0 0.0
    %1063 = vmatprep.subr.mxu0 0.0
    %1064 = vmatpush1.xpose.msra.mxu0 0.0
    %1065 = vmatprep.subr.mxu0 0.0
    %1066 = vmatpush1.xpose.msra.mxu0 0.0
    %1067 = vmatprep.subr.mxu0 0.0
    %1068 = vmatpush1.xpose.msra.mxu0 0.0
    %1069 = vmatprep.subr.mxu0 0.0
    %1070 = vmatpush1.xpose.msra.mxu0 0.0
    %1071 = vmatprep.subr.mxu0 0.0
    %1072 = vmatpush1.xpose.msra.mxu0 0.0
    %1073 = vmatprep.subr.mxu0 0.0
    %1074 = vmatpush1.xpose.msra.mxu0 0.0
    %1075 = vmatprep.subr.mxu0 0.0
    %1076 = vmatpush1.xpose.msra.mxu0 0.0
    %1077 = vmatprep.subr.mxu0 0.0
    %1078 = vmatpush1.xpose.msra.mxu0 0.0
    %1079 = vmatprep.subr.mxu0 0.0
    %1080 = vmatpush1.xpose.msra.mxu0 0.0
    %1081 = vmatprep.subr.mxu0 0.0
    %1082 = vmatpush1.xpose.msra.mxu0 0.0
    %1083 = vmatprep.subr.mxu0 0.0
    %1084 = vmatpush1.xpose.msra.mxu0 0.0
    %1085 = vmatprep.subr.mxu0 0.0
    %1086 = vmatpush1.xpose.msra.mxu0 0.0
    %1087 = vmatprep.mubr.f32.mxu0 0.0
    %v1088 = vand.u32 %v791, 4294901760
    %v1089 = vsub.f32 %v791, %v1088
    %v1090 = vand.u32 %v1089, 4294901760
    %1091 = vmatmul.mubr.f32.gmra.mrb[0].mxu0 %v1090
    %v1092 = vpop.f32.mrb[0].mxu0
    %v1093 = vadd.f32 %v1019, %v1092
    %v1094 = vpop.f32.mrb[0].mxu0
    %1095 = vdwg.mxu0
    %1096 = vmatprep.subr.mxu0 0.0
    %v1097 = vand.u32 %v794, 4294901760
    %v1098 = vsub.f32 %v794, %v1097
    %v1099 = vand.u32 %v1098, 4294901760
    %1100 = vmatpush1.xpose.msra.mxu0 %v1099
    %1101 = vmatprep.subr.mxu0 0.0
    %1102 = vmatpush1.xpose.msra.mxu0 0.0
    %1103 = vmatprep.subr.mxu0 0.0
    %1104 = vmatpush1.xpose.msra.mxu0 0.0
    %1105 = vmatprep.subr.mxu0 0.0
    %1106 = vmatpush1.xpose.msra.mxu0 0.0
    %1107 = vmatprep.subr.mxu0 0.0
    %1108 = vmatpush1.xpose.msra.mxu0 0.0
    %1109 = vmatprep.subr.mxu0 0.0
    %1110 = vmatpush1.xpose.msra.mxu0 0.0
    %1111 = vmatprep.subr.mxu0 0.0
    %1112 = vmatpush1.xpose.msra.mxu0 0.0
    %1113 = vmatprep.subr.mxu0 0.0
    %1114 = vmatpush1.xpose.msra.mxu0 0.0
    %1115 = vmatprep.subr.mxu0 0.0
    %1116 = vmatpush1.xpose.msra.mxu0 0.0
    %1117 = vmatprep.subr.mxu0 0.0
    %1118 = vmatpush1.xpose.msra.mxu0 0.0
    %1119 = vmatprep.subr.mxu0 0.0
    %1120 = vmatpush1.xpose.msra.mxu0 0.0
    %1121 = vmatprep.subr.mxu0 0.0
    %1122 = vmatpush1.xpose.msra.mxu0 0.0
    %1123 = vmatprep.subr.mxu0 0.0
    %1124 = vmatpush1.xpose.msra.mxu0 0.0
    %1125 = vmatprep.subr.mxu0 0.0
    %1126 = vmatpush1.xpose.msra.mxu0 0.0
    %1127 = vmatprep.subr.mxu0 0.0
    %1128 = vmatpush1.xpose.msra.mxu0 0.0
    %1129 = vmatprep.subr.mxu0 0.0
    %1130 = vmatpush1.xpose.msra.mxu0 0.0
    %1131 = vmatprep.subr.mxu0 0.0
    %1132 = vmatpush1.xpose.msra.mxu0 0.0
    %1133 = vmatprep.subr.mxu0 0.0
    %1134 = vmatpush1.xpose.msra.mxu0 0.0
    %1135 = vmatprep.subr.mxu0 0.0
    %1136 = vmatpush1.xpose.msra.mxu0 0.0
    %1137 = vmatprep.subr.mxu0 0.0
    %1138 = vmatpush1.xpose.msra.mxu0 0.0
    %1139 = vmatprep.subr.mxu0 0.0
    %1140 = vmatpush1.xpose.msra.mxu0 0.0
    %1141 = vmatprep.subr.mxu0 0.0
    %1142 = vmatpush1.xpose.msra.mxu0 0.0
    %1143 = vmatprep.subr.mxu0 0.0
    %1144 = vmatpush1.xpose.msra.mxu0 0.0
    %1145 = vmatprep.subr.mxu0 0.0
    %1146 = vmatpush1.xpose.msra.mxu0 0.0
    %1147 = vmatprep.subr.mxu0 0.0
    %1148 = vmatpush1.xpose.msra.mxu0 0.0
    %1149 = vmatprep.subr.mxu0 0.0
    %1150 = vmatpush1.xpose.msra.mxu0 0.0
    %1151 = vmatprep.subr.mxu0 0.0
    %1152 = vmatpush1.xpose.msra.mxu0 0.0
    %1153 = vmatprep.subr.mxu0 0.0
    %1154 = vmatpush1.xpose.msra.mxu0 0.0
    %1155 = vmatprep.subr.mxu0 0.0
    %1156 = vmatpush1.xpose.msra.mxu0 0.0
    %1157 = vmatprep.subr.mxu0 0.0
    %1158 = vmatpush1.xpose.msra.mxu0 0.0
    %1159 = vmatprep.subr.mxu0 0.0
    %1160 = vmatpush1.xpose.msra.mxu0 0.0
    %1161 = vmatprep.subr.mxu0 0.0
    %1162 = vmatpush1.xpose.msra.mxu0 0.0
    %1163 = vmatprep.mubr.f32.mxu0 0.0
    %v1164 = vand.u32 %v791, 4294901760
    %1165 = vmatmul.mubr.f32.gmra.mrb[0].mxu0 %v1164
    %v1166 = vpop.f32.mrb[0].mxu0
    %v1167 = vadd.f32 %v1093, %v1166
    %v1168 = vpop.f32.mrb[0].mxu0
    %1169 = vdwg.mxu0
    %1170 = vmatprep.subr.mxu0 0.0
    %v1171 = vand.u32 %v794, 4294901760
    %1172 = vmatpush1.xpose.msra.mxu0 %v1171
    %1173 = vmatprep.subr.mxu0 0.0
    %1174 = vmatpush1.xpose.msra.mxu0 0.0
    %1175 = vmatprep.subr.mxu0 0.0
    %1176 = vmatpush1.xpose.msra.mxu0 0.0
    %1177 = vmatprep.subr.mxu0 0.0
    %1178 = vmatpush1.xpose.msra.mxu0 0.0
    %1179 = vmatprep.subr.mxu0 0.0
    %1180 = vmatpush1.xpose.msra.mxu0 0.0
    %1181 = vmatprep.subr.mxu0 0.0
    %1182 = vmatpush1.xpose.msra.mxu0 0.0
    %1183 = vmatprep.subr.mxu0 0.0
    %1184 = vmatpush1.xpose.msra.mxu0 0.0
    %1185 = vmatprep.subr.mxu0 0.0
    %1186 = vmatpush1.xpose.msra.mxu0 0.0
    %1187 = vmatprep.subr.mxu0 0.0
    %1188 = vmatpush1.xpose.msra.mxu0 0.0
    %1189 = vmatprep.subr.mxu0 0.0
    %1190 = vmatpush1.xpose.msra.mxu0 0.0
    %1191 = vmatprep.subr.mxu0 0.0
    %1192 = vmatpush1.xpose.msra.mxu0 0.0
    %1193 = vmatprep.subr.mxu0 0.0
    %1194 = vmatpush1.xpose.msra.mxu0 0.0
    %1195 = vmatprep.subr.mxu0 0.0
    %1196 = vmatpush1.xpose.msra.mxu0 0.0
    %1197 = vmatprep.subr.mxu0 0.0
    %1198 = vmatpush1.xpose.msra.mxu0 0.0
    %1199 = vmatprep.subr.mxu0 0.0
    %1200 = vmatpush1.xpose.msra.mxu0 0.0
    %1201 = vmatprep.subr.mxu0 0.0
    %1202 = vmatpush1.xpose.msra.mxu0 0.0
    %1203 = vmatprep.subr.mxu0 0.0
    %1204 = vmatpush1.xpose.msra.mxu0 0.0
    %1205 = vmatprep.subr.mxu0 0.0
    %1206 = vmatpush1.xpose.msra.mxu0 0.0
    %1207 = vmatprep.subr.mxu0 0.0
    %1208 = vmatpush1.xpose.msra.mxu0 0.0
    %1209 = vmatprep.subr.mxu0 0.0
    %1210 = vmatpush1.xpose.msra.mxu0 0.0
    %1211 = vmatprep.subr.mxu0 0.0
    %1212 = vmatpush1.xpose.msra.mxu0 0.0
    %1213 = vmatprep.subr.mxu0 0.0
    %1214 = vmatpush1.xpose.msra.mxu0 0.0
    %1215 = vmatprep.subr.mxu0 0.0
    %1216 = vmatpush1.xpose.msra.mxu0 0.0
    %1217 = vmatprep.subr.mxu0 0.0
    %1218 = vmatpush1.xpose.msra.mxu0 0.0
    %1219 = vmatprep.subr.mxu0 0.0
    %1220 = vmatpush1.xpose.msra.mxu0 0.0
    %1221 = vmatprep.subr.mxu0 0.0
    %1222 = vmatpush1.xpose.msra.mxu0 0.0
    %1223 = vmatprep.subr.mxu0 0.0
    %1224 = vmatpush1.xpose.msra.mxu0 0.0
    %1225 = vmatprep.subr.mxu0 0.0
    %1226 = vmatpush1.xpose.msra.mxu0 0.0
    %1227 = vmatprep.subr.mxu0 0.0
    %1228 = vmatpush1.xpose.msra.mxu0 0.0
    %1229 = vmatprep.subr.mxu0 0.0
    %1230 = vmatpush1.xpose.msra.mxu0 0.0
    %1231 = vmatprep.subr.mxu0 0.0
    %1232 = vmatpush1.xpose.msra.mxu0 0.0
    %1233 = vmatprep.subr.mxu0 0.0
    %1234 = vmatpush1.xpose.msra.mxu0 0.0
    %1235 = vmatprep.mubr.f32.mxu0 0.0
    %v1236 = vand.u32 %v791, 4294901760
    %1237 = vmatmul.mubr.f32.gmra.mrb[0].mxu0 %v1236
    %v1238 = vpop.f32.mrb[0].mxu0
    %v1239 = vadd.f32 %v1167, %v1238
    %v1240 = vpop.f32.mrb[0].mxu0
    %1241 = vdwg.mxu0
    %vm1242 = vcmask 57344
    %1243 = vst.msk [vmem:[#allocation2] sm:$0x1] %vm1242, %v1239
    // Predicated region
    $region22: #{tpu_custom_call.1} parent=1 // pred_check
      _
    $region23: #{tpu_custom_call.1} parent=1 // pred_check_branch
      %1245 = sbr.rel (0) target = $region25
    $region24: #{tpu_custom_call.1} parent=1 // pred_region
      %s1247 = ssub.s32 16, 16
      %1248 = vsyncadd [#allocation3], %s1247
      %s1250 = sshll.u32 [#allocation2], 4
      %s1251 = int_to_ptr.vmem [resolvable:$true] %s1250
      %1253 = dma.vmem_to_hbm [thread:$0]  %s1251, 16, %s5, [#allocation3]
    $region25: #{tpu_custom_call.1} parent=1 // pred_fallthru
      _
    // Predicated region
    $region26: #{tpu_custom_call.1} parent=1 // pred_check
      _
    $region27: #{tpu_custom_call.1} parent=1 // pred_check_branch
      %1255 = sbr.rel (0) target = $region29
    $region28: #{tpu_custom_call.1} parent=1 // pred_region
      %1256 = dma.done [#allocation3], 16
    $region29: #{tpu_custom_call.1} parent=1 // pred_fallthru
      _
    %1257 = vsyncpa [#allocation3], 1

</llo_original>
